<compile_context>
chip_gen: v6e
topology: v6e:2x2x1
jax: 0.10.0
libtpu: 0.0.40
codegen_flags: <defaults>
</compile_context>

<pallas_src>
import jax
import jax.numpy as jnp
from jax import lax
from jax.experimental import pallas as pl
from jax.experimental.pallas import tpu as pltpu


DEFAULT_COMPUTE_DTYPE = jnp.bfloat16   # MXU operand dtype; accumulation is f32
_MXU_FUSE_LIMIT = 256                  # head-fusion width gate (v6e/v7x MXU tile)


def _round_up(x, m):
    return ((x + m - 1) // m) * m


def _block_bytes(shape, dtype):
    n = 1
    for s in shape:
        n *= int(s)
    return n * jnp.dtype(dtype).itemsize


def _vmem_limit(blocks, extra_bytes=0):
    """Scoped-VMEM budget from double-buffered block footprint (clamped)."""
    est = 2 * sum(_block_bytes(s, d) for s, d in blocks) + extra_bytes + (2 << 20)
    return int(min(56 << 20, max(32 << 20, est)))


# ----------------------------------------------------------------------------
# Parameter init (PyTorch-Linear-like uniform(-1/sqrt(fan_in))); weights are
# stored (in_features, out_features) so the non-transposed kernels do x @ W + b.
# ----------------------------------------------------------------------------
def _init_linear(key, fan_in, fan_out):
    kw, kb = jax.random.split(key)
    scale = 1.0 / float(fan_in) ** 0.5
    w = jax.random.uniform(kw, (fan_in, fan_out), jnp.float32, -scale, scale)
    b = jax.random.uniform(kb, (1, fan_out), jnp.float32, -scale, scale)
    return w, b


def mlp_params(key, ninp, nout, nhid, nlayers):
    """`nlayers` hidden layers of width nhid (ReLU), then a linear output layer."""
    dims = [ninp] + [nhid] * nlayers + [nout]
    keys = jax.random.split(key, len(dims) - 1)
    return [_init_linear(k, dims[i], dims[i + 1]) for i, k in enumerate(keys)]


def _block_diag(a, b):
    z_tr = jnp.zeros((a.shape[0], b.shape[1]), a.dtype)
    z_bl = jnp.zeros((b.shape[0], a.shape[1]), a.dtype)
    return jnp.concatenate(
        [jnp.concatenate([a, z_tr], axis=1),
         jnp.concatenate([z_bl, b], axis=1)], axis=0)


def combine_head_params(mean_p, std_p):
    """Fuse two parallel head MLPs into one wide MLP ([mean | std] columns)."""
    combined = []
    for i, ((wm, bm), (ws, bs)) in enumerate(zip(mean_p, std_p)):
        w = jnp.concatenate([wm, ws], axis=1) if i == 0 else _block_diag(wm, ws)
        b = jnp.concatenate([bm, bs], axis=1)
        combined.append((w, b))
    return combined


def _make_head(mean_p, std_p, fuse_limit=_MXU_FUSE_LIMIT):
    """Fuse heads only while the fused width fits one MXU tile; otherwise keep
    the two heads separate (same FLOPs, no zero-block waste)."""
    widths = [w.shape[1] for w, _ in mean_p] + [w.shape[1] for w, _ in std_p]
    if 2 * max(widths) <= fuse_limit:
        return combine_head_params(mean_p, std_p), (len(mean_p),)
    return list(mean_p) + list(std_p), (len(mean_p), len(std_p))


def _cast_wb(params, compute_dtype):
    """bf16 (or f32) matmul operands; biases stay f32 (added post-accumulation)."""
    return [(w.astype(compute_dtype), b.astype(jnp.float32)) for w, b in params]


def _transpose_wb(params):
    """(in,out)/(1,out) -> (out,in)/(out,1) for the transposed (lane-dense) decoder."""
    return [(w.T, b.T) for w, b in params]


# ----------------------------------------------------------------------------
# In-kernel helpers
# ----------------------------------------------------------------------------
def _apply_mlp(h, wb_refs, n_linear, transposed=False):
    """Chain of linears with ReLU between them, linear final layer.

    transposed=False:  h (rows, feat),  w (in, out),  b (1, out)
    transposed=True:   h (feat, rows),  w (out, in),  b (out, 1)
    Operands are cast to the weight dtype (bf16); accumulation is f32.
    """
    for i in range(n_linear):
        w = wb_refs[2 * i][...]
        b = wb_refs[2 * i + 1][...]
        if transposed:
            h = jnp.dot(w, h.astype(w.dtype), preferred_element_type=jnp.float32) + b
        else:
            h = jnp.dot(h.astype(w.dtype), w, preferred_element_type=jnp.float32) + b
        if i < n_linear - 1:
            h = jnp.maximum(h, 0.0)
    return h


def _apply_heads(h, wb_refs, layout, transposed=False):
    """Apply one fused head (layout=(n,)) or two separate heads (layout=(n,n))."""
    outs, off = [], 0
    for n_lin in layout:
        outs.append(_apply_mlp(h, wb_refs[off:off + 2 * n_lin], n_lin, transposed))
        off += 2 * n_lin
    if len(outs) == 1:
        return outs[0]
    return jnp.concatenate(outs, axis=0 if transposed else 1)


# ----------------------------------------------------------------------------
# Kernel 1: fused context path
#   grid = (context-row tiles,)  ["arbitrary" reduction]
#   encoder MLP on each row tile -> accumulate per-batch mean via precomputed
#   averaging matrix -> (last step) z-encoder + fused zmean|zstd head ->
#   sigmoid scale -> reparameterized sample -> decoder z projection zb.
#   Single packed (B, 3*nlatent + nhid) store [q_mu | q_sigma | z | zb].
# ----------------------------------------------------------------------------
def make_context_kernel(n_enc, n_zsh, zhead_layout, nlatent):
    def kernel(avg_ref, xy_ref, eps_ref, *refs):
        rsum_ref = refs[-1]          # VMEM scratch (B, nrep) f32 accumulator
        out_ref = refs[-2]
        b1_ref = refs[-3]            # decoder first-layer bias (1, nhid)
        w1z_ref = refs[-4]           # decoder first-layer z weight (nlatent, nhid)
        wbs = refs[:-4]
        enc_wb = wbs[:2 * n_enc]
        zsh_wb = wbs[2 * n_enc: 2 * (n_enc + n_zsh)]
        zh_wb = wbs[2 * (n_enc + n_zsh):]

        t = pl.program_id(0)

        @pl.when(t == 0)
        def _():
            rsum_ref[...] = jnp.zeros_like(rsum_ref)

        # encoder MLP on this context-row tile
        r = _apply_mlp(xy_ref[...], enc_wb, n_enc)             # (t_rows, nrep) f32
        # partial per-batch mean; avg tile is (B, t_rows), zero on padded rows
        avg = avg_ref[...]
        rsum_ref[...] += jnp.dot(avg, r.astype(avg.dtype),
                                 preferred_element_type=jnp.float32)

        @pl.when(t == pl.num_programs(0) - 1)
        def _():
            r_mean = rsum_ref[...]                             # (B, nrep)
            s = _apply_mlp(r_mean, zsh_wb, n_zsh)              # (B, z_nhid)
            head = _apply_heads(s, zh_wb, zhead_layout)        # (B, 2*nlatent)
            q_mu = head[:, :nlatent]
            q_sigma = 0.1 + 0.9 * jax.nn.sigmoid(head[:, nlatent:])
            z = q_mu + q_sigma * eps_ref[...]                  # rsample (eps supplied)
            # decoder first-layer z projection (+ bias): the decoder kernel then
            # only needs  relu(W1x @ x^T + zb)  — no z broadcast / select there.
            w1z = w1z_ref[...]
            zb = jnp.dot(z.astype(w1z.dtype), w1z,
                         preferred_element_type=jnp.float32) + b1_ref[...]
            out_ref[...] = jnp.concatenate([q_mu, q_sigma, z, zb], axis=1)

    return kernel


def _context_row_tiling(n_rows, max_tile=512):
    r8 = _round_up(n_rows, 8)
    if r8 <= max_tile:
        return r8, r8                       # single row tile (== full padded extent)
    pnc = _round_up(n_rows, 128)            # tiled: last-dim blocks need 128-multiples
    for cand in (max_tile, 384, 256, 128):
        if pnc % cand == 0:
            return cand, pnc
    return 128, pnc


def context_forward(xy2d, eps, enc_p, zsh_p, zh_p, zhead_layout, w1z, b1,
                    B, Nc, nlatent, compute_dtype):
    n_rows, din = xy2d.shape                # n_rows = B * Nc
    nhid = int(w1z.shape[1])
    nrep = int(enc_p[-1][0].shape[1])
    t_rows, pnc = _context_row_tiling(n_rows)

    # pad context rows; the averaging matrix gives padded rows zero weight
    xy = xy2d.astype(compute_dtype)
    if pnc > n_rows:
        xy = jnp.pad(xy, ((0, pnc - n_rows), (0, 0)))
    col = jnp.arange(pnc)
    mask = (col[None, :] // Nc == jnp.arange(B)[:, None]) & (col[None, :] < n_rows)
    avg = (mask.astype(jnp.float32) / float(Nc)).astype(compute_dtype)   # (B, pnc)

    flat = [a for wb in (enc_p + zsh_p + zh_p) for a in wb] + [w1z, b1]
    out_width = 3 * nlatent + nhid
    grid = (pnc // t_rows,)

    in_specs = [pl.BlockSpec((B, t_rows), lambda t: (0, t)),
                pl.BlockSpec((t_rows, din), lambda t: (t, 0)),
                pl.BlockSpec((B, nlatent), lambda t: (0, 0))]
    in_specs += [pl.BlockSpec(p.shape, lambda t: (0, 0)) for p in flat]

    blocks = ([((B, t_rows), compute_dtype), ((t_rows, din), compute_dtype),
               ((B, nlatent), jnp.float32), ((B, out_width), jnp.float32)]
              + [(p.shape, p.dtype) for p in flat])
    vmem_bytes = _vmem_limit(blocks, extra_bytes=_block_bytes((B, nrep), jnp.float32))

    out = pl.pallas_call(
        make_context_kernel(len(enc_p), len(zsh_p), zhead_layout, nlatent),
        grid=grid,
        in_specs=in_specs,
        out_specs=pl.BlockSpec((B, out_width), lambda t: (0, 0)),
        out_shape=jax.ShapeDtypeStruct((B, out_width), jnp.float32),
        scratch_shapes=[pltpu.VMEM((B, nrep), jnp.float32)],
        compiler_params=pltpu.CompilerParams(
            dimension_semantics=("arbitrary",),
            vmem_limit_bytes=vmem_bytes),
    )(avg, xy, eps, *flat)

    q_mu = out[:, :nlatent]
    q_sigma = out[:, nlatent:2 * nlatent]
    z = out[:, 2 * nlatent:3 * nlatent]
    zb = out[:, 3 * nlatent:]               # (B, nhid) = z @ W1z + b1
    return q_mu, q_sigma, z, zb


# ----------------------------------------------------------------------------
# Kernel 2: fused decoder (transposed layout: rows on lanes -> lane-dense store)
#   grid = (batch, target-row tiles), both "parallel".
#   h = relu(W1x @ x^T + zb_col);  remaining shared linears;  fused [mean;std]
#   head;  sigma rows get 0.1 + 0.9*softplus;  single (2*nout, tnt) store.
# ----------------------------------------------------------------------------
def make_decoder_kernel(n_rest, head_layout, nout):
    def kernel(x_ref, zb_ref, w1x_ref, *refs):
        out_ref = refs[-1]
        wbs = refs[:-1]
        rest_wb = wbs[:2 * n_rest]
        head_wb = wbs[2 * n_rest:]

        xT = x_ref[0]                        # (ninp, tnt), compute dtype
        zb = zb_ref[0]                       # (nhid, 1) f32 per-batch z projection
        w1x = w1x_ref[...]                   # (nhid, ninp)
        h = jnp.dot(w1x, xT.astype(w1x.dtype),
                    preferred_element_type=jnp.float32) + zb
        h = jnp.maximum(h, 0.0)
        h = _apply_mlp(h, rest_wb, n_rest, transposed=True)        # (nhid, tnt)

        y = _apply_heads(h, head_wb, head_layout, transposed=True)  # (2*nout, tnt)
        rowp = lax.broadcasted_iota(jnp.int32, y.shape, 0)
        # rows [0, nout) = mean, rows [nout, 2*nout) = 0.1 + 0.9*softplus(pre_sigma)
        # (softplus on the mean rows is free: they share the same padded vreg tile)
        out_ref[0] = jnp.where(rowp < nout, y, 0.1 + 0.9 * jax.nn.softplus(y))

    return kernel


def _decoder_row_tiling(Nt, B, max_tile=512):
    nt8 = _round_up(Nt, 8)
    if nt8 <= max_tile and B >= 2:
        return nt8, nt8                      # single row tile; batch axis feeds megacore
    nt_pad = _round_up(Nt, 128)              # tiled: last-dim blocks need 128-multiples
    for cand in (max_tile, 384, 256, 128):
        if nt_pad % cand == 0:
            return cand, nt_pad
    return 128, nt_pad


def decoder_forward(x_target, zb, w1x_t, rest_t, head_t, head_layout,
                    nout, nhid, compute_dtype):
    B, Nt, ninp = x_target.shape
    tnt, nt_pad = _decoder_row_tiling(Nt, B)

    xT = jnp.swapaxes(x_target, 1, 2).astype(compute_dtype)     # (B, ninp, Nt)
    if nt_pad > Nt:
        xT = jnp.pad(xT, ((0, 0), (0, 0), (0, nt_pad - Nt)))
    zbT = zb[:, :, None].astype(jnp.float32)                    # (B, nhid, 1)
    grid = (B, nt_pad // tnt)

    flat = [w1x_t] + [a for wb in rest_t for a in wb] + [a for wb in head_t for a in wb]
    in_specs = [pl.BlockSpec((1, ninp, tnt), lambda b, t: (b, 0, t)),
                pl.BlockSpec((1, nhid, 1), lambda b, t: (b, 0, 0))]
    # TODO(synk): single-buffer the constant-index weight blocks via
    # pipeline_mode=pl.Buffered(1) once confirmed on the deployed jax version
    # (halves resident weight VMEM on v7x's 64 MiB).
    in_specs += [pl.BlockSpec(p.shape, lambda b, t: (0, 0)) for p in flat]

    blocks = ([((1, ninp, tnt), compute_dtype), ((1, nhid, 1), jnp.float32),
               ((1, 2 * nout, tnt), jnp.float32)]
              + [(p.shape, p.dtype) for p in flat])
    vmem_bytes = _vmem_limit(blocks)

    out = pl.pallas_call(
        make_decoder_kernel(len(rest_t), head_layout, nout),
        grid=grid,
        in_specs=in_specs,
        out_specs=pl.BlockSpec((1, 2 * nout, tnt), lambda b, t: (b, 0, t)),
        out_shape=jax.ShapeDtypeStruct((B, 2 * nout, nt_pad), jnp.float32),
        compiler_params=pltpu.CompilerParams(
            dimension_semantics=("parallel", "parallel"),
            vmem_limit_bytes=vmem_bytes),
    )(xT, zbT, *flat)

    out = out[:, :, :Nt]                                        # drop padded rows
    y_mu = jnp.swapaxes(out[:, :nout, :], 1, 2)                 # (B, Nt, nout)
    y_sigma = jnp.swapaxes(out[:, nout:, :], 1, 2)
    return y_mu, y_sigma


# ----------------------------------------------------------------------------
# NeuralProcess (eval-mode forward; use_deterministic_path=False, attender=None)
# ----------------------------------------------------------------------------
class NeuralProcessPallas:
    def __init__(self, ninp, nout, nrep, nlatent, nhid, nlayers=3, nz_layers=2,
                 key=None, compute_dtype=DEFAULT_COMPUTE_DTYPE):
        if key is None:
            key = jax.random.PRNGKey(0)
        k1, k2, k3, k4, k5, k6, k7 = jax.random.split(key, 7)
        cd = compute_dtype

        # master f32 parameters (also used by the plain-JAX reference)
        self.enc_params = mlp_params(k1, ninp + nout, nrep, nhid, nlayers)
        z_nhid = min(nrep, nlatent) + abs(nlatent - nrep) // 2
        self.z_shared = mlp_params(k2, nrep, z_nhid, z_nhid, nz_layers)
        self.z_mean = mlp_params(k3, z_nhid, nlatent, z_nhid, 2)
        self.z_std = mlp_params(k4, z_nhid, nlatent, z_nhid, 2)
        dec_ninp = ninp + nlatent            # use_deterministic_path=False
        self.dec_shared = mlp_params(k5, dec_ninp, nhid, nhid, nlayers)
        self.dec_ymean = mlp_params(k6, nhid, nout, nhid, 1)
        self.dec_ystd = mlp_params(k7, nhid, nout, nhid, 1)

        # kernel-ready parameters (bf16 matmul operands, f32 biases)
        z_head, self.z_head_layout = _make_head(self.z_mean, self.z_std)
        dec_head, self.dec_head_layout = _make_head(self.dec_ymean, self.dec_ystd)

        self.k_enc = _cast_wb(self.enc_params, cd)
        self.k_zsh = _cast_wb(self.z_shared, cd)
        self.k_zhead = _cast_wb(z_head, cd)

        w1, b1 = self.dec_shared[0]
        self.k_dec_w1x_t = w1[:ninp, :].T.astype(cd)       # (nhid, ninp)  decoder x path
        self.k_dec_w1z = w1[ninp:, :].astype(cd)           # (nlatent, nhid)  ctx kernel
        self.k_dec_b1 = b1.astype(jnp.float32)             # (1, nhid)        ctx kernel
        self.k_dec_rest_t = _transpose_wb(_cast_wb(self.dec_shared[1:], cd))
        self.k_dec_head_t = _transpose_wb(_cast_wb(dec_head, cd))

        self.ninp, self.nout, self.nlatent, self.nhid = ninp, nout, nlatent, nhid
        self.compute_dtype = cd

    def __call__(self, x_context, y_context, x_target, eps):
        """eps: reparameterization noise of shape (B, nlatent)."""
        B, Nc, _ = x_context.shape
        xy = jnp.concatenate([x_context, y_context], axis=-1).reshape(B * Nc, -1)

        # fused: encoder MLP + per-batch mean + z-encoder + heads + rsample + z@W1z
        q_mu, q_sigma, z, zb = context_forward(
            xy, eps.astype(jnp.float32), self.k_enc, self.k_zsh, self.k_zhead,
            self.z_head_layout, self.k_dec_w1z, self.k_dec_b1,
            B, Nc, self.nlatent, self.compute_dtype)

        # fused decoder (transposed layout, lane-dense packed mean/std output)
        y_mu, y_sigma = decoder_forward(
            x_target, zb, self.k_dec_w1x_t, self.k_dec_rest_t,
            self.k_dec_head_t, self.dec_head_layout,
            self.nout, self.nhid, self.compute_dtype)

        # eval mode: q_target is None (training branch needs y_target)
        return (y_mu, y_sigma), (q_mu, q_sigma), None


# ----------------------------------------------------------------------------
# Plain-JAX reference (raw f32 params) for validation.
# ----------------------------------------------------------------------------
def reference_forward(model, x_context, y_context, x_target, eps):
    hp = lax.Precision.HIGHEST

    def mlp(x, params):
        for i, (w, b) in enumerate(params):
            x = jnp.dot(x, w, precision=hp) + b
            if i < len(params) - 1:
                x = jnp.maximum(x, 0.0)
        return x

    B, Nc, _ = x_context.shape
    _, Nt, _ = x_target.shape
    xy = jnp.concatenate([x_context, y_context], -1).reshape(B * Nc, -1)
    r = mlp(xy, model.enc_params).reshape(B, Nc, -1).mean(axis=1)
    s = mlp(r, model.z_shared)
    q_mu = mlp(s, model.z_mean)
    q_sigma = 0.1 + 0.9 * jax.nn.sigmoid(mlp(s, model.z_std))
    z = q_mu + q_sigma * eps
    z_rep = jnp.repeat(z[:, None, :], Nt, axis=1)
    xz = jnp.concatenate([x_target, z_rep], -1).reshape(B * Nt, -1)
    h = mlp(xz, model.dec_shared)
    y_mu = mlp(h, model.dec_ymean).reshape(B, Nt, -1)
    y_sigma = (0.1 + 0.9 * jax.nn.softplus(mlp(h, model.dec_ystd))).reshape(B, Nt, -1)
    return y_mu, y_sigma, q_mu, q_sigma


# ----------------------------------------------------------------------------
if __name__ == "__main__":
    key = jax.random.PRNGKey(0)
    kparams, kx, ky, kxt, keps = jax.random.split(key, 5)

    B, Nc, Nt = 2, 8, 16
    ninp, nout, nrep, nlatent, nhid = 4, 2, 8, 8, 32

    model = NeuralProcessPallas(ninp, nout, nrep, nlatent, nhid,
                                nlayers=3, nz_layers=2, key=kparams)

    x_context = jax.random.normal(kx, (B, Nc, ninp), jnp.float32)
    y_context = jax.random.normal(ky, (B, Nc, nout), jnp.float32)
    x_target = jax.random.normal(kxt, (B, Nt, ninp), jnp.float32)
    eps = jax.random.normal(keps, (B, nlatent), jnp.float32)

    (y_mu, y_sigma), (q_mu, q_sigma), q_target = model(
        x_context, y_context, x_target, eps)
    jax.block_until_ready((y_mu, y_sigma, q_mu, q_sigma))

    assert y_mu.shape == (B, Nt, nout)
    assert y_sigma.shape == (B, Nt, nout)
    assert q_mu.shape == (B, nlatent)
    assert q_sigma.shape == (B, nlatent)
    assert bool(jnp.all(y_sigma > 0.099)) and bool(jnp.all(q_sigma > 0.099))
    assert q_target is None

    # numerical check against the plain-JAX f32 reference (kernels use bf16
    # matmul operands with f32 accumulation -> 5e-2 tolerance has ample margin)
    ry_mu, ry_sigma, rq_mu, rq_sigma = reference_forward(
        model, x_context, y_context, x_target, eps)
    assert bool(jnp.allclose(q_mu, rq_mu, atol=5e-2, rtol=5e-2))
    assert bool(jnp.allclose(q_sigma, rq_sigma, atol=5e-2, rtol=5e-2))
    assert bool(jnp.allclose(y_mu, ry_mu, atol=5e-2, rtol=5e-2))
    assert bool(jnp.allclose(y_sigma, ry_sigma, atol=5e-2, rtol=5e-2))

    print("KERNEL_OK")
</pallas_src>

<mosaic_0001>
module attributes {stable_mosaic.version = 11 : i64} {
  func.func @kernel(%arg0: i32, %arg1: memref<2x16xbf16, #tpu.memory_space<vmem>>, %arg2: memref<16x6xbf16, #tpu.memory_space<vmem>>, %arg3: memref<2x8xf32, #tpu.memory_space<vmem>>, %arg4: memref<6x32xbf16, #tpu.memory_space<vmem>>, %arg5: memref<1x32xf32, #tpu.memory_space<vmem>>, %arg6: memref<32x32xbf16, #tpu.memory_space<vmem>>, %arg7: memref<1x32xf32, #tpu.memory_space<vmem>>, %arg8: memref<32x32xbf16, #tpu.memory_space<vmem>>, %arg9: memref<1x32xf32, #tpu.memory_space<vmem>>, %arg10: memref<32x8xbf16, #tpu.memory_space<vmem>>, %arg11: memref<1x8xf32, #tpu.memory_space<vmem>>, %arg12: memref<8x8xbf16, #tpu.memory_space<vmem>>, %arg13: memref<1x8xf32, #tpu.memory_space<vmem>>, %arg14: memref<8x8xbf16, #tpu.memory_space<vmem>>, %arg15: memref<1x8xf32, #tpu.memory_space<vmem>>, %arg16: memref<8x8xbf16, #tpu.memory_space<vmem>>, %arg17: memref<1x8xf32, #tpu.memory_space<vmem>>, %arg18: memref<8x16xbf16, #tpu.memory_space<vmem>>, %arg19: memref<1x16xf32, #tpu.memory_space<vmem>>, %arg20: memref<16x16xbf16, #tpu.memory_space<vmem>>, %arg21: memref<1x16xf32, #tpu.memory_space<vmem>>, %arg22: memref<16x16xbf16, #tpu.memory_space<vmem>>, %arg23: memref<1x16xf32, #tpu.memory_space<vmem>>, %arg24: memref<8x32xbf16, #tpu.memory_space<vmem>>, %arg25: memref<1x32xf32, #tpu.memory_space<vmem>>, %arg26: memref<2x56xf32, #tpu.memory_space<vmem>>, %arg27: memref<2x8xf32, #tpu.memory_space<vmem>>) attributes {dimension_semantics = [#tpu.dimension_semantics<arbitrary>], iteration_bounds = array<i64: 1>, scalar_prefetch = 0 : i64, scratch_operands = 1 : i64, tpu.core_type = #tpu.core_type<tc>, window_params = [{transform_indices = @transform_0, window_bounds = array<i64: 2, 16>}, {transform_indices = @transform_1, window_bounds = array<i64: 16, 6>}, {pipeline_mode = #tpu.pipeline_mode<synchronous>, transform_indices = @transform_2, window_bounds = array<i64: 2, 8>}, {pipeline_mode = #tpu.pipeline_mode<synchronous>, transform_indices = @transform_3, window_bounds = array<i64: 6, 32>}, {pipeline_mode = #tpu.pipeline_mode<synchronous>, transform_indices = @transform_4, window_bounds = array<i64: 1, 32>}, {pipeline_mode = #tpu.pipeline_mode<synchronous>, transform_indices = @transform_5, window_bounds = array<i64: 32, 32>}, {pipeline_mode = #tpu.pipeline_mode<synchronous>, transform_indices = @transform_6, window_bounds = array<i64: 1, 32>}, {pipeline_mode = #tpu.pipeline_mode<synchronous>, transform_indices = @transform_7, window_bounds = array<i64: 32, 32>}, {pipeline_mode = #tpu.pipeline_mode<synchronous>, transform_indices = @transform_8, window_bounds = array<i64: 1, 32>}, {pipeline_mode = #tpu.pipeline_mode<synchronous>, transform_indices = @transform_9, window_bounds = array<i64: 32, 8>}, {pipeline_mode = #tpu.pipeline_mode<synchronous>, transform_indices = @transform_10, window_bounds = array<i64: 1, 8>}, {pipeline_mode = #tpu.pipeline_mode<synchronous>, transform_indices = @transform_11, window_bounds = array<i64: 8, 8>}, {pipeline_mode = #tpu.pipeline_mode<synchronous>, transform_indices = @transform_12, window_bounds = array<i64: 1, 8>}, {pipeline_mode = #tpu.pipeline_mode<synchronous>, transform_indices = @transform_13, window_bounds = array<i64: 8, 8>}, {pipeline_mode = #tpu.pipeline_mode<synchronous>, transform_indices = @transform_14, window_bounds = array<i64: 1, 8>}, {pipeline_mode = #tpu.pipeline_mode<synchronous>, transform_indices = @transform_15, window_bounds = array<i64: 8, 8>}, {pipeline_mode = #tpu.pipeline_mode<synchronous>, transform_indices = @transform_16, window_bounds = array<i64: 1, 8>}, {pipeline_mode = #tpu.pipeline_mode<synchronous>, transform_indices = @transform_17, window_bounds = array<i64: 8, 16>}, {pipeline_mode = #tpu.pipeline_mode<synchronous>, transform_indices = @transform_18, window_bounds = array<i64: 1, 16>}, {pipeline_mode = #tpu.pipeline_mode<synchronous>, transform_indices = @transform_19, window_bounds = array<i64: 16, 16>}, {pipeline_mode = #tpu.pipeline_mode<synchronous>, transform_indices = @transform_20, window_bounds = array<i64: 1, 16>}, {pipeline_mode = #tpu.pipeline_mode<synchronous>, transform_indices = @transform_21, window_bounds = array<i64: 16, 16>}, {pipeline_mode = #tpu.pipeline_mode<synchronous>, transform_indices = @transform_22, window_bounds = array<i64: 1, 16>}, {pipeline_mode = #tpu.pipeline_mode<synchronous>, transform_indices = @transform_23, window_bounds = array<i64: 8, 32>}, {pipeline_mode = #tpu.pipeline_mode<synchronous>, transform_indices = @transform_24, window_bounds = array<i64: 1, 32>}, {pipeline_mode = #tpu.pipeline_mode<synchronous>, transform_indices = @transform_25, window_bounds = array<i64: 2, 56>}]} {
    %c0_i32 = arith.constant 0 : i32
    %0 = arith.cmpi eq, %arg0, %c0_i32 : i32
    %1 = arith.extui %0 : i1 to i32
    %c0_i32_0 = arith.constant 0 : i32
    %2 = arith.cmpi ne, %1, %c0_i32_0 : i32
    scf.if %2 {
      %cst_33 = arith.constant 0.000000e+00 : f32
      %42 = vector.broadcast %cst_33 : f32 to vector<2x8xf32>
      %c0_34 = arith.constant 0 : index
      %c0_35 = arith.constant 0 : index
      %43 = vector.load %arg27[%c0_34, %c0_35] : memref<2x8xf32, #tpu.memory_space<vmem>>, vector<2x8xf32>
      tpu.vector_store %arg27[%c0_34, %c0_35], %42 {strides = array<i32>} : memref<2x8xf32, #tpu.memory_space<vmem>>, vector<2x8xf32>,
    } else {
    }
    %c0 = arith.constant 0 : index
    %c0_1 = arith.constant 0 : index
    %3 = vector.load %arg2[%c0, %c0_1] : memref<16x6xbf16, #tpu.memory_space<vmem>>, vector<16x6xbf16>
    %c0_2 = arith.constant 0 : index
    %c0_3 = arith.constant 0 : index
    %4 = vector.load %arg4[%c0_2, %c0_3] : memref<6x32xbf16, #tpu.memory_space<vmem>>, vector<6x32xbf16>
    %c0_4 = arith.constant 0 : index
    %c0_5 = arith.constant 0 : index
    %5 = vector.load %arg5[%c0_4, %c0_5] : memref<1x32xf32, #tpu.memory_space<vmem>>, vector<1x32xf32>
    %cst = arith.constant dense<0.000000e+00> : vector<16x32xf32>
    %6 = tpu.matmul %3, %4, %cst {dimension_numbers = #tpu.dot_dimension_numbers<[1], [0], [0], [1], [0, 0, 1, 1], [], []>} : vector<16x6xbf16>, vector<6x32xbf16>, vector<16x32xf32> -> vector<16x32xf32>
    %7 = vector.broadcast %5 : vector<1x32xf32> to vector<16x32xf32>
    %8 = arith.addf %6, %7 : vector<16x32xf32>
    %cst_6 = arith.constant 0.000000e+00 : f32
    %9 = vector.broadcast %cst_6 : f32 to vector<16x32xf32>
    %10 = arith.maximumf %8, %9 : vector<16x32xf32>
    %c0_7 = arith.constant 0 : index
    %c0_8 = arith.constant 0 : index
    %11 = vector.load %arg6[%c0_7, %c0_8] : memref<32x32xbf16, #tpu.memory_space<vmem>>, vector<32x32xbf16>
    %c0_9 = arith.constant 0 : index
    %c0_10 = arith.constant 0 : index
    %12 = vector.load %arg7[%c0_9, %c0_10] : memref<1x32xf32, #tpu.memory_space<vmem>>, vector<1x32xf32>
    %13 = arith.truncf %10 : vector<16x32xf32> to vector<16x32xbf16>
    %cst_11 = arith.constant dense<0.000000e+00> : vector<16x32xf32>
    %14 = tpu.matmul %13, %11, %cst_11 {dimension_numbers = #tpu.dot_dimension_numbers<[1], [0], [0], [1], [0, 0, 1, 1], [], []>} : vector<16x32xbf16>, vector<32x32xbf16>, vector<16x32xf32> -> vector<16x32xf32>
    %15 = vector.broadcast %12 : vector<1x32xf32> to vector<16x32xf32>
    %16 = arith.addf %14, %15 : vector<16x32xf32>
    %cst_12 = arith.constant 0.000000e+00 : f32
    %17 = vector.broadcast %cst_12 : f32 to vector<16x32xf32>
    %18 = arith.maximumf %16, %17 : vector<16x32xf32>
    %c0_13 = arith.constant 0 : index
    %c0_14 = arith.constant 0 : index
    %19 = vector.load %arg8[%c0_13, %c0_14] : memref<32x32xbf16, #tpu.memory_space<vmem>>, vector<32x32xbf16>
    %c0_15 = arith.constant 0 : index
    %c0_16 = arith.constant 0 : index
    %20 = vector.load %arg9[%c0_15, %c0_16] : memref<1x32xf32, #tpu.memory_space<vmem>>, vector<1x32xf32>
    %21 = arith.truncf %18 : vector<16x32xf32> to vector<16x32xbf16>
    %cst_17 = arith.constant dense<0.000000e+00> : vector<16x32xf32>
    %22 = tpu.matmul %21, %19, %cst_17 {dimension_numbers = #tpu.dot_dimension_numbers<[1], [0], [0], [1], [0, 0, 1, 1], [], []>} : vector<16x32xbf16>, vector<32x32xbf16>, vector<16x32xf32> -> vector<16x32xf32>
    %23 = vector.broadcast %20 : vector<1x32xf32> to vector<16x32xf32>
    %24 = arith.addf %22, %23 : vector<16x32xf32>
    %cst_18 = arith.constant 0.000000e+00 : f32
    %25 = vector.broadcast %cst_18 : f32 to vector<16x32xf32>
    %26 = arith.maximumf %24, %25 : vector<16x32xf32>
    %c0_19 = arith.constant 0 : index
    %c0_20 = arith.constant 0 : index
    %27 = vector.load %arg10[%c0_19, %c0_20] : memref<32x8xbf16, #tpu.memory_space<vmem>>, vector<32x8xbf16>
    %c0_21 = arith.constant 0 : index
    %c0_22 = arith.constant 0 : index
    %28 = vector.load %arg11[%c0_21, %c0_22] : memref<1x8xf32, #tpu.memory_space<vmem>>, vector<1x8xf32>
    %29 = arith.truncf %26 : vector<16x32xf32> to vector<16x32xbf16>
    %cst_23 = arith.constant dense<0.000000e+00> : vector<16x8xf32>
    %30 = tpu.matmul %29, %27, %cst_23 {dimension_numbers = #tpu.dot_dimension_numbers<[1], [0], [0], [1], [0, 0, 1, 1], [], []>} : vector<16x32xbf16>, vector<32x8xbf16>, vector<16x8xf32> -> vector<16x8xf32>
    %31 = vector.broadcast %28 : vector<1x8xf32> to vector<16x8xf32>
    %32 = arith.addf %30, %31 : vector<16x8xf32>
    %c0_24 = arith.constant 0 : index
    %c0_25 = arith.constant 0 : index
    %33 = vector.load %arg1[%c0_24, %c0_25] : memref<2x16xbf16, #tpu.memory_space<vmem>>, vector<2x16xbf16>
    %c0_26 = arith.constant 0 : index
    %c0_27 = arith.constant 0 : index
    %34 = vector.load %arg27[%c0_26, %c0_27] : memref<2x8xf32, #tpu.memory_space<vmem>>, vector<2x8xf32>
    %35 = arith.truncf %32 : vector<16x8xf32> to vector<16x8xbf16>
    %cst_28 = arith.constant dense<0.000000e+00> : vector<2x8xf32>
    %36 = tpu.matmul %33, %35, %cst_28 {dimension_numbers = #tpu.dot_dimension_numbers<[1], [0], [0], [1], [0, 0, 1, 1], [], []>} : vector<2x16xbf16>, vector<16x8xbf16>, vector<2x8xf32> -> vector<2x8xf32>
    %37 = arith.addf %34, %36 : vector<2x8xf32>
    %c0_29 = arith.constant 0 : index
    %c0_30 = arith.constant 0 : index
    %38 = vector.load %arg27[%c0_29, %c0_30] : memref<2x8xf32, #tpu.memory_space<vmem>>, vector<2x8xf32>
    tpu.vector_store %arg27[%c0_29, %c0_30], %37 {strides = array<i32>} : memref<2x8xf32, #tpu.memory_space<vmem>>, vector<2x8xf32>,
    %c0_i32_31 = arith.constant 0 : i32
    %39 = arith.cmpi eq, %arg0, %c0_i32_31 : i32
    %40 = arith.extui %39 : i1 to i32
    %c0_i32_32 = arith.constant 0 : i32
    %41 = arith.cmpi ne, %40, %c0_i32_32 : i32
    scf.if %41 {
      %c0_33 = arith.constant 0 : index
      %c0_34 = arith.constant 0 : index
      %42 = vector.load %arg27[%c0_33, %c0_34] : memref<2x8xf32, #tpu.memory_space<vmem>>, vector<2x8xf32>
      %c0_35 = arith.constant 0 : index
      %c0_36 = arith.constant 0 : index
      %43 = vector.load %arg12[%c0_35, %c0_36] : memref<8x8xbf16, #tpu.memory_space<vmem>>, vector<8x8xbf16>
      %c0_37 = arith.constant 0 : index
      %c0_38 = arith.constant 0 : index
      %44 = vector.load %arg13[%c0_37, %c0_38] : memref<1x8xf32, #tpu.memory_space<vmem>>, vector<1x8xf32>
      %45 = arith.truncf %42 : vector<2x8xf32> to vector<2x8xbf16>
      %cst_39 = arith.constant dense<0.000000e+00> : vector<2x8xf32>
      %46 = tpu.matmul %45, %43, %cst_39 {dimension_numbers = #tpu.dot_dimension_numbers<[1], [0], [0], [1], [0, 0, 1, 1], [], []>} : vector<2x8xbf16>, vector<8x8xbf16>, vector<2x8xf32> -> vector<2x8xf32>
      %47 = vector.broadcast %44 : vector<1x8xf32> to vector<2x8xf32>
      %48 = arith.addf %46, %47 : vector<2x8xf32>
      %cst_40 = arith.constant 0.000000e+00 : f32
      %49 = vector.broadcast %cst_40 : f32 to vector<2x8xf32>
      %50 = arith.maximumf %48, %49 : vector<2x8xf32>
      %c0_41 = arith.constant 0 : index
      %c0_42 = arith.constant 0 : index
      %51 = vector.load %arg14[%c0_41, %c0_42] : memref<8x8xbf16, #tpu.memory_space<vmem>>, vector<8x8xbf16>
      %c0_43 = arith.constant 0 : index
      %c0_44 = arith.constant 0 : index
      %52 = vector.load %arg15[%c0_43, %c0_44] : memref<1x8xf32, #tpu.memory_space<vmem>>, vector<1x8xf32>
      %53 = arith.truncf %50 : vector<2x8xf32> to vector<2x8xbf16>
      %cst_45 = arith.constant dense<0.000000e+00> : vector<2x8xf32>
      %54 = tpu.matmul %53, %51, %cst_45 {dimension_numbers = #tpu.dot_dimension_numbers<[1], [0], [0], [1], [0, 0, 1, 1], [], []>} : vector<2x8xbf16>, vector<8x8xbf16>, vector<2x8xf32> -> vector<2x8xf32>
      %55 = vector.broadcast %52 : vector<1x8xf32> to vector<2x8xf32>
      %56 = arith.addf %54, %55 : vector<2x8xf32>
      %cst_46 = arith.constant 0.000000e+00 : f32
      %57 = vector.broadcast %cst_46 : f32 to vector<2x8xf32>
      %58 = arith.maximumf %56, %57 : vector<2x8xf32>
      %c0_47 = arith.constant 0 : index
      %c0_48 = arith.constant 0 : index
      %59 = vector.load %arg16[%c0_47, %c0_48] : memref<8x8xbf16, #tpu.memory_space<vmem>>, vector<8x8xbf16>
      %c0_49 = arith.constant 0 : index
      %c0_50 = arith.constant 0 : index
      %60 = vector.load %arg17[%c0_49, %c0_50] : memref<1x8xf32, #tpu.memory_space<vmem>>, vector<1x8xf32>
      %61 = arith.truncf %58 : vector<2x8xf32> to vector<2x8xbf16>
      %cst_51 = arith.constant dense<0.000000e+00> : vector<2x8xf32>
      %62 = tpu.matmul %61, %59, %cst_51 {dimension_numbers = #tpu.dot_dimension_numbers<[1], [0], [0], [1], [0, 0, 1, 1], [], []>} : vector<2x8xbf16>, vector<8x8xbf16>, vector<2x8xf32> -> vector<2x8xf32>
      %63 = vector.broadcast %60 : vector<1x8xf32> to vector<2x8xf32>
      %64 = arith.addf %62, %63 : vector<2x8xf32>
      %c0_52 = arith.constant 0 : index
      %c0_53 = arith.constant 0 : index
      %65 = vector.load %arg18[%c0_52, %c0_53] : memref<8x16xbf16, #tpu.memory_space<vmem>>, vector<8x16xbf16>
      %c0_54 = arith.constant 0 : index
      %c0_55 = arith.constant 0 : index
      %66 = vector.load %arg19[%c0_54, %c0_55] : memref<1x16xf32, #tpu.memory_space<vmem>>, vector<1x16xf32>
      %67 = arith.truncf %64 : vector<2x8xf32> to vector<2x8xbf16>
      %cst_56 = arith.constant dense<0.000000e+00> : vector<2x16xf32>
      %68 = tpu.matmul %67, %65, %cst_56 {dimension_numbers = #tpu.dot_dimension_numbers<[1], [0], [0], [1], [0, 0, 1, 1], [], []>} : vector<2x8xbf16>, vector<8x16xbf16>, vector<2x16xf32> -> vector<2x16xf32>
      %69 = vector.broadcast %66 : vector<1x16xf32> to vector<2x16xf32>
      %70 = arith.addf %68, %69 : vector<2x16xf32>
      %cst_57 = arith.constant 0.000000e+00 : f32
      %71 = vector.broadcast %cst_57 : f32 to vector<2x16xf32>
      %72 = arith.maximumf %70, %71 : vector<2x16xf32>
      %c0_58 = arith.constant 0 : index
      %c0_59 = arith.constant 0 : index
      %73 = vector.load %arg20[%c0_58, %c0_59] : memref<16x16xbf16, #tpu.memory_space<vmem>>, vector<16x16xbf16>
      %c0_60 = arith.constant 0 : index
      %c0_61 = arith.constant 0 : index
      %74 = vector.load %arg21[%c0_60, %c0_61] : memref<1x16xf32, #tpu.memory_space<vmem>>, vector<1x16xf32>
      %75 = arith.truncf %72 : vector<2x16xf32> to vector<2x16xbf16>
      %cst_62 = arith.constant dense<0.000000e+00> : vector<2x16xf32>
      %76 = tpu.matmul %75, %73, %cst_62 {dimension_numbers = #tpu.dot_dimension_numbers<[1], [0], [0], [1], [0, 0, 1, 1], [], []>} : vector<2x16xbf16>, vector<16x16xbf16>, vector<2x16xf32> -> vector<2x16xf32>
      %77 = vector.broadcast %74 : vector<1x16xf32> to vector<2x16xf32>
      %78 = arith.addf %76, %77 : vector<2x16xf32>
      %cst_63 = arith.constant 0.000000e+00 : f32
      %79 = vector.broadcast %cst_63 : f32 to vector<2x16xf32>
      %80 = arith.maximumf %78, %79 : vector<2x16xf32>
      %c0_64 = arith.constant 0 : index
      %c0_65 = arith.constant 0 : index
      %81 = vector.load %arg22[%c0_64, %c0_65] : memref<16x16xbf16, #tpu.memory_space<vmem>>, vector<16x16xbf16>
      %c0_66 = arith.constant 0 : index
      %c0_67 = arith.constant 0 : index
      %82 = vector.load %arg23[%c0_66, %c0_67] : memref<1x16xf32, #tpu.memory_space<vmem>>, vector<1x16xf32>
      %83 = arith.truncf %80 : vector<2x16xf32> to vector<2x16xbf16>
      %cst_68 = arith.constant dense<0.000000e+00> : vector<2x16xf32>
      %84 = tpu.matmul %83, %81, %cst_68 {dimension_numbers = #tpu.dot_dimension_numbers<[1], [0], [0], [1], [0, 0, 1, 1], [], []>} : vector<2x16xbf16>, vector<16x16xbf16>, vector<2x16xf32> -> vector<2x16xf32>
      %85 = vector.broadcast %82 : vector<1x16xf32> to vector<2x16xf32>
      %86 = arith.addf %84, %85 : vector<2x16xf32>
      %87 = vector.extract_strided_slice %86 {offsets = [0, 0], sizes = [2, 8], strides = [1, 1]} : vector<2x16xf32> to vector<2x8xf32>
      %88 = vector.extract_strided_slice %86 {offsets = [0, 8], sizes = [2, 8], strides = [1, 1]} : vector<2x16xf32> to vector<2x8xf32>
      %89 = arith.negf %88 : vector<2x8xf32>
      %90 = math.exp %89 : vector<2x8xf32>
      %cst_69 = arith.constant 1.000000e+00 : f32
      %91 = vector.broadcast %cst_69 : f32 to vector<2x8xf32>
      %92 = arith.addf %91, %90 : vector<2x8xf32>
      %93 = arith.divf %91, %92 : vector<2x8xf32>
      %cst_70 = arith.constant 0.899999976 : f32
      %94 = vector.broadcast %cst_70 : f32 to vector<2x8xf32>
      %95 = arith.mulf %94, %93 : vector<2x8xf32>
      %cst_71 = arith.constant 1.000000e-01 : f32
      %96 = vector.broadcast %cst_71 : f32 to vector<2x8xf32>
      %97 = arith.addf %96, %95 : vector<2x8xf32>
      %c0_72 = arith.constant 0 : index
      %c0_73 = arith.constant 0 : index
      %98 = vector.load %arg3[%c0_72, %c0_73] : memref<2x8xf32, #tpu.memory_space<vmem>>, vector<2x8xf32>
      %99 = arith.mulf %97, %98 : vector<2x8xf32>
      %100 = arith.addf %87, %99 : vector<2x8xf32>
      %c0_74 = arith.constant 0 : index
      %c0_75 = arith.constant 0 : index
      %101 = vector.load %arg24[%c0_74, %c0_75] : memref<8x32xbf16, #tpu.memory_space<vmem>>, vector<8x32xbf16>
      %102 = arith.truncf %100 : vector<2x8xf32> to vector<2x8xbf16>
      %cst_76 = arith.constant dense<0.000000e+00> : vector<2x32xf32>
      %103 = tpu.matmul %102, %101, %cst_76 {dimension_numbers = #tpu.dot_dimension_numbers<[1], [0], [0], [1], [0, 0, 1, 1], [], []>} : vector<2x8xbf16>, vector<8x32xbf16>, vector<2x32xf32> -> vector<2x32xf32>
      %c0_77 = arith.constant 0 : index
      %c0_78 = arith.constant 0 : index
      %104 = vector.load %arg25[%c0_77, %c0_78] : memref<1x32xf32, #tpu.memory_space<vmem>>, vector<1x32xf32>
      %105 = vector.broadcast %104 : vector<1x32xf32> to vector<2x32xf32>
      %106 = arith.addf %103, %105 : vector<2x32xf32>
      %107 = tpu.concatenate %87, %97, %100, %106 in 1 : vector<2x8xf32>, vector<2x8xf32>, vector<2x8xf32>, vector<2x32xf32> -> vector<2x56xf32>
      %c0_79 = arith.constant 0 : index
      %c0_80 = arith.constant 0 : index
      %108 = vector.load %arg26[%c0_79, %c0_80] : memref<2x56xf32, #tpu.memory_space<vmem>>, vector<2x56xf32>
      tpu.vector_store %arg26[%c0_79, %c0_80], %107 {strides = array<i32>} : memref<2x56xf32, #tpu.memory_space<vmem>>, vector<2x56xf32>,
    } else {
    }
    return
  }
  func.func @transform_0(%arg0: i32) -> (i32, i32) {
    %c0_i32 = arith.constant 0 : i32
    %c0_i32_0 = arith.constant 0 : i32
    return %c0_i32, %arg0 : i32, i32
  }
  func.func @transform_1(%arg0: i32) -> (i32, i32) {
    %c0_i32 = arith.constant 0 : i32
    %c0_i32_0 = arith.constant 0 : i32
    return %arg0, %c0_i32 : i32, i32
  }
  func.func @transform_2(%arg0: i32) -> (i32, i32) {
    %c0_i32 = arith.constant 0 : i32
    %c0_i32_0 = arith.constant 0 : i32
    %c0_i32_1 = arith.constant 0 : i32
    return %c0_i32, %c0_i32_0 : i32, i32
  }
  func.func @transform_3(%arg0: i32) -> (i32, i32) {
    %c0_i32 = arith.constant 0 : i32
    %c0_i32_0 = arith.constant 0 : i32
    %c0_i32_1 = arith.constant 0 : i32
    return %c0_i32, %c0_i32_0 : i32, i32
  }
  func.func @transform_4(%arg0: i32) -> (i32, i32) {
    %c0_i32 = arith.constant 0 : i32
    %c0_i32_0 = arith.constant 0 : i32
    %c0_i32_1 = arith.constant 0 : i32
    return %c0_i32, %c0_i32_0 : i32, i32
  }
  func.func @transform_5(%arg0: i32) -> (i32, i32) {
    %c0_i32 = arith.constant 0 : i32
    %c0_i32_0 = arith.constant 0 : i32
    %c0_i32_1 = arith.constant 0 : i32
    return %c0_i32, %c0_i32_0 : i32, i32
  }
  func.func @transform_6(%arg0: i32) -> (i32, i32) {
    %c0_i32 = arith.constant 0 : i32
    %c0_i32_0 = arith.constant 0 : i32
    %c0_i32_1 = arith.constant 0 : i32
    return %c0_i32, %c0_i32_0 : i32, i32
  }
  func.func @transform_7(%arg0: i32) -> (i32, i32) {
    %c0_i32 = arith.constant 0 : i32
    %c0_i32_0 = arith.constant 0 : i32
    %c0_i32_1 = arith.constant 0 : i32
    return %c0_i32, %c0_i32_0 : i32, i32
  }
  func.func @transform_8(%arg0: i32) -> (i32, i32) {
    %c0_i32 = arith.constant 0 : i32
    %c0_i32_0 = arith.constant 0 : i32
    %c0_i32_1 = arith.constant 0 : i32
    return %c0_i32, %c0_i32_0 : i32, i32
  }
  func.func @transform_9(%arg0: i32) -> (i32, i32) {
    %c0_i32 = arith.constant 0 : i32
    %c0_i32_0 = arith.constant 0 : i32
    %c0_i32_1 = arith.constant 0 : i32
    return %c0_i32, %c0_i32_0 : i32, i32
  }
  func.func @transform_10(%arg0: i32) -> (i32, i32) {
    %c0_i32 = arith.constant 0 : i32
    %c0_i32_0 = arith.constant 0 : i32
    %c0_i32_1 = arith.constant 0 : i32
    return %c0_i32, %c0_i32_0 : i32, i32
  }
  func.func @transform_11(%arg0: i32) -> (i32, i32) {
    %c0_i32 = arith.constant 0 : i32
    %c0_i32_0 = arith.constant 0 : i32
    %c0_i32_1 = arith.constant 0 : i32
    return %c0_i32, %c0_i32_0 : i32, i32
  }
  func.func @transform_12(%arg0: i32) -> (i32, i32) {
    %c0_i32 = arith.constant 0 : i32
    %c0_i32_0 = arith.constant 0 : i32
    %c0_i32_1 = arith.constant 0 : i32
    return %c0_i32, %c0_i32_0 : i32, i32
  }
  func.func @transform_13(%arg0: i32) -> (i32, i32) {
    %c0_i32 = arith.constant 0 : i32
    %c0_i32_0 = arith.constant 0 : i32
    %c0_i32_1 = arith.constant 0 : i32
    return %c0_i32, %c0_i32_0 : i32, i32
  }
  func.func @transform_14(%arg0: i32) -> (i32, i32) {
    %c0_i32 = arith.constant 0 : i32
    %c0_i32_0 = arith.constant 0 : i32
    %c0_i32_1 = arith.constant 0 : i32
    return %c0_i32, %c0_i32_0 : i32, i32
  }
  func.func @transform_15(%arg0: i32) -> (i32, i32) {
    %c0_i32 = arith.constant 0 : i32
    %c0_i32_0 = arith.constant 0 : i32
    %c0_i32_1 = arith.constant 0 : i32
    return %c0_i32, %c0_i32_0 : i32, i32
  }
  func.func @transform_16(%arg0: i32) -> (i32, i32) {
    %c0_i32 = arith.constant 0 : i32
    %c0_i32_0 = arith.constant 0 : i32
    %c0_i32_1 = arith.constant 0 : i32
    return %c0_i32, %c0_i32_0 : i32, i32
  }
  func.func @transform_17(%arg0: i32) -> (i32, i32) {
    %c0_i32 = arith.constant 0 : i32
    %c0_i32_0 = arith.constant 0 : i32
    %c0_i32_1 = arith.constant 0 : i32
    return %c0_i32, %c0_i32_0 : i32, i32
  }
  func.func @transform_18(%arg0: i32) -> (i32, i32) {
    %c0_i32 = arith.constant 0 : i32
    %c0_i32_0 = arith.constant 0 : i32
    %c0_i32_1 = arith.constant 0 : i32
    return %c0_i32, %c0_i32_0 : i32, i32
  }
  func.func @transform_19(%arg0: i32) -> (i32, i32) {
    %c0_i32 = arith.constant 0 : i32
    %c0_i32_0 = arith.constant 0 : i32
    %c0_i32_1 = arith.constant 0 : i32
    return %c0_i32, %c0_i32_0 : i32, i32
  }
  func.func @transform_20(%arg0: i32) -> (i32, i32) {
    %c0_i32 = arith.constant 0 : i32
    %c0_i32_0 = arith.constant 0 : i32
    %c0_i32_1 = arith.constant 0 : i32
    return %c0_i32, %c0_i32_0 : i32, i32
  }
  func.func @transform_21(%arg0: i32) -> (i32, i32) {
    %c0_i32 = arith.constant 0 : i32
    %c0_i32_0 = arith.constant 0 : i32
    %c0_i32_1 = arith.constant 0 : i32
    return %c0_i32, %c0_i32_0 : i32, i32
  }
  func.func @transform_22(%arg0: i32) -> (i32, i32) {
    %c0_i32 = arith.constant 0 : i32
    %c0_i32_0 = arith.constant 0 : i32
    %c0_i32_1 = arith.constant 0 : i32
    return %c0_i32, %c0_i32_0 : i32, i32
  }
  func.func @transform_23(%arg0: i32) -> (i32, i32) {
    %c0_i32 = arith.constant 0 : i32
    %c0_i32_0 = arith.constant 0 : i32
    %c0_i32_1 = arith.constant 0 : i32
    return %c0_i32, %c0_i32_0 : i32, i32
  }
  func.func @transform_24(%arg0: i32) -> (i32, i32) {
    %c0_i32 = arith.constant 0 : i32
    %c0_i32_0 = arith.constant 0 : i32
    %c0_i32_1 = arith.constant 0 : i32
    return %c0_i32, %c0_i32_0 : i32, i32
  }
  func.func @transform_25(%arg0: i32) -> (i32, i32) {
    %c0_i32 = arith.constant 0 : i32
    %c0_i32_0 = arith.constant 0 : i32
    %c0_i32_1 = arith.constant 0 : i32
    return %c0_i32, %c0_i32_0 : i32, i32
  }
}

</mosaic_0001>

<llo_original>
// kernel: tpu_custom_call.1
$region0: #{tpu_custom_call.1}
  #allocation0 [shape = 'u32[]', space=smem, size = 0x4, offset = 0x4, fixed_abs, tag = 'smem constant byte address 0x4 - core index']
  #allocation1 [shape = 'u32[144,128]{1,0:T(1,128)}', space=vmem, size = 0x12000, scoped, tag = 'internal scratch']
  #allocation2 [shape = 'f32[2,8]{1,0:T(2,128)}', space=vmem, size = 0x400, scoped, tag = 'scratch operand']
  %s0 = inlined_call_operand.hbm [shape: bf16[2,16], index: 0, kind: input, shape index: {}]
  %s1 = inlined_call_operand.vmem [shape: bf16[16,6], index: 1, kind: input, shape index: {}]
  %s2 = inlined_call_operand.hbm [shape: f32[2,8], index: 2, kind: input, shape index: {}]
  %s3 = inlined_call_operand.hbm [shape: bf16[6,32], index: 3, kind: input, shape index: {}]
  %s4 = inlined_call_operand.hbm [shape: f32[1,32], index: 4, kind: input, shape index: {}]
  %s5 = inlined_call_operand.vmem [shape: bf16[32,32], index: 5, kind: input, shape index: {}]
  %s6 = inlined_call_operand.hbm [shape: f32[1,32], index: 6, kind: input, shape index: {}]
  %s7 = inlined_call_operand.vmem [shape: bf16[32,32], index: 7, kind: input, shape index: {}]
  %s8 = inlined_call_operand.hbm [shape: f32[1,32], index: 8, kind: input, shape index: {}]
  %s9 = inlined_call_operand.vmem [shape: bf16[32,8], index: 9, kind: input, shape index: {}]
  %s10 = inlined_call_operand.hbm [shape: f32[1,8], index: 10, kind: input, shape index: {}]
  %s11 = inlined_call_operand.vmem [shape: bf16[8,8], index: 11, kind: input, shape index: {}]
  %s12 = inlined_call_operand.hbm [shape: f32[1,8], index: 12, kind: input, shape index: {}]
  %s13 = inlined_call_operand.hbm [shape: bf16[8,8], index: 13, kind: input, shape index: {}]
  %s14 = inlined_call_operand.hbm [shape: f32[1,8], index: 14, kind: input, shape index: {}]
  %s15 = inlined_call_operand.vmem [shape: bf16[8,8], index: 15, kind: input, shape index: {}]
  %s16 = inlined_call_operand.hbm [shape: f32[1,8], index: 16, kind: input, shape index: {}]
  %s17 = inlined_call_operand.vmem [shape: bf16[8,16], index: 17, kind: input, shape index: {}]
  %s18 = inlined_call_operand.hbm [shape: f32[1,16], index: 18, kind: input, shape index: {}]
  %s19 = inlined_call_operand.vmem [shape: bf16[16,16], index: 19, kind: input, shape index: {}]
  %s20 = inlined_call_operand.vmem [shape: f32[1,16], index: 20, kind: input, shape index: {}]
  %s21 = inlined_call_operand.vmem [shape: bf16[16,16], index: 21, kind: input, shape index: {}]
  %s22 = inlined_call_operand.vmem [shape: f32[1,16], index: 22, kind: input, shape index: {}]
  %s23 = inlined_call_operand.vmem [shape: bf16[8,32], index: 23, kind: input, shape index: {}]
  %s24 = inlined_call_operand.vmem [shape: f32[1,32], index: 24, kind: input, shape index: {}]
  %s25 = inlined_call_operand.hbm [shape: f32[2,56], index: 25, kind: output, shape index: {}]
  %s26 = sld [smem:[#allocation0]]
  $region166: #{tpu_custom_call.1} parent=0
    _
  %s28 = ssub.s32 1, %s26
  %s29 = scalar_select 0, %s28, %s26
  $region1: #{tpu_custom_call.1} parent=0
    #allocation3 [shape = 'u8[512]{0}', space=vmem, size = 0x400, scoped, tag = 'input window, operand 0, single buffered']
    #allocation4 [shape = 's32[1]{0}', space=sflag, size = 0x4, scoped, tag = 'scoped memory for tpu_custom_call.1']
    #allocation5 [shape = 's32[1]{0}', space=sflag, size = 0x4, scoped, tag = 'scoped memory for tpu_custom_call.1']
    #allocation6 [shape = 'u8[1024]{0}', space=vmem, size = 0x400, scoped, tag = 'input window, operand 2, single buffered']
    #allocation7 [shape = 's32[1]{0}', space=sflag, size = 0x4, scoped, tag = 'scoped memory for tpu_custom_call.1']
    #allocation8 [shape = 'u8[2048]{0}', space=vmem, size = 0x800, scoped, tag = 'input window, operand 3, single buffered']
    #allocation9 [shape = 'u8[512]{0}', space=vmem, size = 0x400, scoped, tag = 'input window, operand 4, single buffered']
    #allocation10 [shape = 's32[1]{0}', space=sflag, size = 0x4, scoped, tag = 'scoped memory for tpu_custom_call.1']
    #allocation11 [shape = 'u8[512]{0}', space=vmem, size = 0x400, scoped, tag = 'input window, operand 6, single buffered']
    #allocation12 [shape = 'u8[512]{0}', space=vmem, size = 0x400, scoped, tag = 'input window, operand 8, single buffered']
    #allocation13 [shape = 's32[1]{0}', space=sflag, size = 0x4, scoped, tag = 'scoped memory for tpu_custom_call.1']
    #allocation14 [shape = 'u8[512]{0}', space=vmem, size = 0x400, scoped, tag = 'input window, operand 10, single buffered']
    #allocation15 [shape = 'u8[512]{0}', space=vmem, size = 0x400, scoped, tag = 'input window, operand 12, single buffered']
    #allocation16 [shape = 's32[1]{0}', space=sflag, size = 0x4, scoped, tag = 'scoped memory for tpu_custom_call.1']
    #allocation17 [shape = 'u8[2048]{0}', space=vmem, size = 0x800, scoped, tag = 'input window, operand 13, single buffered']
    #allocation18 [shape = 'u8[512]{0}', space=vmem, size = 0x400, scoped, tag = 'input window, operand 14, single buffered']
    #allocation19 [shape = 's32[1]{0}', space=sflag, size = 0x4, scoped, tag = 'scoped memory for tpu_custom_call.1']
    #allocation20 [shape = 'u8[512]{0}', space=vmem, size = 0x400, scoped, tag = 'input window, operand 16, single buffered']
    #allocation21 [shape = 'u8[512]{0}', space=vmem, size = 0x400, scoped, tag = 'input window, operand 18, single buffered']
    #allocation22 [shape = 's32[1]{0}', space=sflag, size = 0x4, scoped, tag = 'scoped memory for tpu_custom_call.1']
    #allocation23 [shape = 'u8[1024]{0}', space=vmem, size = 0x400, scoped, tag = 'output window, operand 0, single buffered']
    %30 = vsyncpa [#allocation4], 0
    %31 = vsyncpa [#allocation7], 0
    %32 = vsyncpa [#allocation10], 0
    %33 = vsyncpa [#allocation13], 0
    %34 = vsyncpa [#allocation16], 0
    %35 = vsyncpa [#allocation19], 0
    %36 = vsyncpa [#allocation22], 0
    %37 = vsyncpa [#allocation5], 0
    // Predicated region
    $region2: #{tpu_custom_call.1} parent=1 // pred_check
      _
    $region3: #{tpu_custom_call.1} parent=1 // pred_check_branch
      %39 = sbr.rel (0) target = $region5
    $region4: #{tpu_custom_call.1} parent=1 // pred_region
      %s41 = ssub.s32 16, 16
      %42 = vsyncadd [#allocation4], %s41
      %s44 = sshll.u32 [#allocation3], 4
      %s45 = int_to_ptr.vmem [resolvable:$true] %s44
      %47 = dma.hbm_to_vmem [thread:$0]  %s0, 16, %s45, [#allocation4]
    $region5: #{tpu_custom_call.1} parent=1 // pred_fallthru
      _
    // Predicated region
    $region6: #{tpu_custom_call.1} parent=1 // pred_check
      _
    $region7: #{tpu_custom_call.1} parent=1 // pred_check_branch
      %49 = sbr.rel (0) target = $region9
    $region8: #{tpu_custom_call.1} parent=1 // pred_region
      _
    $region9: #{tpu_custom_call.1} parent=1 // pred_fallthru
      _
    // Predicated region
    $region10: #{tpu_custom_call.1} parent=1 // pred_check
      _
    $region11: #{tpu_custom_call.1} parent=1 // pred_check_branch
      %51 = sbr.rel (0) target = $region13
    $region12: #{tpu_custom_call.1} parent=1 // pred_region
      %s53 = ssub.s32 32, 32
      %54 = vsyncadd [#allocation7], %s53
      %s56 = sshll.u32 [#allocation6], 4
      %s57 = int_to_ptr.vmem [resolvable:$true] %s56
      %59 = dma.hbm_to_vmem [thread:$0]  %s2, 32, %s57, [#allocation7]
    $region13: #{tpu_custom_call.1} parent=1 // pred_fallthru
      _
    // Predicated region
    $region14: #{tpu_custom_call.1} parent=1 // pred_check
      _
    $region15: #{tpu_custom_call.1} parent=1 // pred_check_branch
      %61 = sbr.rel (0) target = $region17
    $region16: #{tpu_custom_call.1} parent=1 // pred_region
      %s63 = ssub.s32 64, 64
      %64 = vsyncadd [#allocation7], %s63
      %s66 = sshll.u32 [#allocation8], 4
      %s67 = int_to_ptr.vmem [resolvable:$true] %s66
      %69 = dma.hbm_to_vmem [thread:$0]  %s3, 64, %s67, [#allocation7]
    $region17: #{tpu_custom_call.1} parent=1 // pred_fallthru
      _
    // Predicated region
    $region18: #{tpu_custom_call.1} parent=1 // pred_check
      _
    $region19: #{tpu_custom_call.1} parent=1 // pred_check_branch
      %71 = sbr.rel (0) target = $region21
    $region20: #{tpu_custom_call.1} parent=1 // pred_region
      %s73 = ssub.s32 16, 16
      %74 = vsyncadd [#allocation10], %s73
      %s76 = sshll.u32 [#allocation9], 4
      %s77 = int_to_ptr.vmem [resolvable:$true] %s76
      %79 = dma.hbm_to_vmem [thread:$0]  %s4, 16, %s77, [#allocation10]
    $region21: #{tpu_custom_call.1} parent=1 // pred_fallthru
      _
    // Predicated region
    $region22: #{tpu_custom_call.1} parent=1 // pred_check
      _
    $region23: #{tpu_custom_call.1} parent=1 // pred_check_branch
      %81 = sbr.rel (0) target = $region25
    $region24: #{tpu_custom_call.1} parent=1 // pred_region
      _
    $region25: #{tpu_custom_call.1} parent=1 // pred_fallthru
      _
    // Predicated region
    $region26: #{tpu_custom_call.1} parent=1 // pred_check
      _
    $region27: #{tpu_custom_call.1} parent=1 // pred_check_branch
      %83 = sbr.rel (0) target = $region29
    $region28: #{tpu_custom_call.1} parent=1 // pred_region
      %s85 = ssub.s32 16, 16
      %86 = vsyncadd [#allocation10], %s85
      %s88 = sshll.u32 [#allocation11], 4
      %s89 = int_to_ptr.vmem [resolvable:$true] %s88
      %91 = dma.hbm_to_vmem [thread:$0]  %s6, 16, %s89, [#allocation10]
    $region29: #{tpu_custom_call.1} parent=1 // pred_fallthru
      _
    // Predicated region
    $region30: #{tpu_custom_call.1} parent=1 // pred_check
      _
    $region31: #{tpu_custom_call.1} parent=1 // pred_check_branch
      %93 = sbr.rel (0) target = $region33
    $region32: #{tpu_custom_call.1} parent=1 // pred_region
      _
    $region33: #{tpu_custom_call.1} parent=1 // pred_fallthru
      _
    // Predicated region
    $region34: #{tpu_custom_call.1} parent=1 // pred_check
      _
    $region35: #{tpu_custom_call.1} parent=1 // pred_check_branch
      %95 = sbr.rel (0) target = $region37
    $region36: #{tpu_custom_call.1} parent=1 // pred_region
      %s97 = ssub.s32 16, 16
      %98 = vsyncadd [#allocation13], %s97
      %s100 = sshll.u32 [#allocation12], 4
      %s101 = int_to_ptr.vmem [resolvable:$true] %s100
      %103 = dma.hbm_to_vmem [thread:$0]  %s8, 16, %s101, [#allocation13]
    $region37: #{tpu_custom_call.1} parent=1 // pred_fallthru
      _
    // Predicated region
    $region38: #{tpu_custom_call.1} parent=1 // pred_check
      _
    $region39: #{tpu_custom_call.1} parent=1 // pred_check_branch
      %105 = sbr.rel (0) target = $region41
    $region40: #{tpu_custom_call.1} parent=1 // pred_region
      _
    $region41: #{tpu_custom_call.1} parent=1 // pred_fallthru
      _
    // Predicated region
    $region42: #{tpu_custom_call.1} parent=1 // pred_check
      _
    $region43: #{tpu_custom_call.1} parent=1 // pred_check_branch
      %107 = sbr.rel (0) target = $region45
    $region44: #{tpu_custom_call.1} parent=1 // pred_region
      %s109 = ssub.s32 16, 16
      %110 = vsyncadd [#allocation13], %s109
      %s112 = sshll.u32 [#allocation14], 4
      %s113 = int_to_ptr.vmem [resolvable:$true] %s112
      %115 = dma.hbm_to_vmem [thread:$0]  %s10, 16, %s113, [#allocation13]
    $region45: #{tpu_custom_call.1} parent=1 // pred_fallthru
      _
    // Predicated region
    $region46: #{tpu_custom_call.1} parent=1 // pred_check
      _
    $region47: #{tpu_custom_call.1} parent=1 // pred_check_branch
      %117 = sbr.rel (0) target = $region49
    $region48: #{tpu_custom_call.1} parent=1 // pred_region
      _
    $region49: #{tpu_custom_call.1} parent=1 // pred_fallthru
      _
    // Predicated region
    $region50: #{tpu_custom_call.1} parent=1 // pred_check
      _
    $region51: #{tpu_custom_call.1} parent=1 // pred_check_branch
      %119 = sbr.rel (0) target = $region53
    $region52: #{tpu_custom_call.1} parent=1 // pred_region
      %s121 = ssub.s32 16, 16
      %122 = vsyncadd [#allocation16], %s121
      %s124 = sshll.u32 [#allocation15], 4
      %s125 = int_to_ptr.vmem [resolvable:$true] %s124
      %127 = dma.hbm_to_vmem [thread:$0]  %s12, 16, %s125, [#allocation16]
    $region53: #{tpu_custom_call.1} parent=1 // pred_fallthru
      _
    // Predicated region
    $region54: #{tpu_custom_call.1} parent=1 // pred_check
      _
    $region55: #{tpu_custom_call.1} parent=1 // pred_check_branch
      %129 = sbr.rel (0) target = $region57
    $region56: #{tpu_custom_call.1} parent=1 // pred_region
      %s131 = ssub.s32 64, 64
      %132 = vsyncadd [#allocation16], %s131
      %s134 = sshll.u32 [#allocation17], 4
      %s135 = int_to_ptr.vmem [resolvable:$true] %s134
      %137 = dma.hbm_to_vmem [thread:$0]  %s13, 64, %s135, [#allocation16]
    $region57: #{tpu_custom_call.1} parent=1 // pred_fallthru
      _
    // Predicated region
    $region58: #{tpu_custom_call.1} parent=1 // pred_check
      _
    $region59: #{tpu_custom_call.1} parent=1 // pred_check_branch
      %139 = sbr.rel (0) target = $region61
    $region60: #{tpu_custom_call.1} parent=1 // pred_region
      %s141 = ssub.s32 16, 16
      %142 = vsyncadd [#allocation19], %s141
      %s144 = sshll.u32 [#allocation18], 4
      %s145 = int_to_ptr.vmem [resolvable:$true] %s144
      %147 = dma.hbm_to_vmem [thread:$0]  %s14, 16, %s145, [#allocation19]
    $region61: #{tpu_custom_call.1} parent=1 // pred_fallthru
      _
    // Predicated region
    $region62: #{tpu_custom_call.1} parent=1 // pred_check
      _
    $region63: #{tpu_custom_call.1} parent=1 // pred_check_branch
      %149 = sbr.rel (0) target = $region65
    $region64: #{tpu_custom_call.1} parent=1 // pred_region
      _
    $region65: #{tpu_custom_call.1} parent=1 // pred_fallthru
      _
    // Predicated region
    $region66: #{tpu_custom_call.1} parent=1 // pred_check
      _
    $region67: #{tpu_custom_call.1} parent=1 // pred_check_branch
      %151 = sbr.rel (0) target = $region69
    $region68: #{tpu_custom_call.1} parent=1 // pred_region
      %s153 = ssub.s32 16, 16
      %154 = vsyncadd [#allocation19], %s153
      %s156 = sshll.u32 [#allocation20], 4
      %s157 = int_to_ptr.vmem [resolvable:$true] %s156
      %159 = dma.hbm_to_vmem [thread:$0]  %s16, 16, %s157, [#allocation19]
    $region69: #{tpu_custom_call.1} parent=1 // pred_fallthru
      _
    // Predicated region
    $region70: #{tpu_custom_call.1} parent=1 // pred_check
      _
    $region71: #{tpu_custom_call.1} parent=1 // pred_check_branch
      %161 = sbr.rel (0) target = $region73
    $region72: #{tpu_custom_call.1} parent=1 // pred_region
      _
    $region73: #{tpu_custom_call.1} parent=1 // pred_fallthru
      _
    // Predicated region
    $region74: #{tpu_custom_call.1} parent=1 // pred_check
      _
    $region75: #{tpu_custom_call.1} parent=1 // pred_check_branch
      %163 = sbr.rel (0) target = $region77
    $region76: #{tpu_custom_call.1} parent=1 // pred_region
      %s165 = ssub.s32 16, 16
      %166 = vsyncadd [#allocation22], %s165
      %s168 = sshll.u32 [#allocation21], 4
      %s169 = int_to_ptr.vmem [resolvable:$true] %s168
      %171 = dma.hbm_to_vmem [thread:$0]  %s18, 16, %s169, [#allocation22]
    $region77: #{tpu_custom_call.1} parent=1 // pred_fallthru
      _
    // Predicated region
    $region78: #{tpu_custom_call.1} parent=1 // pred_check
      _
    $region79: #{tpu_custom_call.1} parent=1 // pred_check_branch
      %173 = sbr.rel (0) target = $region81
    $region80: #{tpu_custom_call.1} parent=1 // pred_region
      _
    $region81: #{tpu_custom_call.1} parent=1 // pred_fallthru
      _
    // Predicated region
    $region82: #{tpu_custom_call.1} parent=1 // pred_check
      _
    $region83: #{tpu_custom_call.1} parent=1 // pred_check_branch
      %175 = sbr.rel (0) target = $region85
    $region84: #{tpu_custom_call.1} parent=1 // pred_region
      _
    $region85: #{tpu_custom_call.1} parent=1 // pred_fallthru
      _
    // Predicated region
    $region86: #{tpu_custom_call.1} parent=1 // pred_check
      _
    $region87: #{tpu_custom_call.1} parent=1 // pred_check_branch
      %177 = sbr.rel (0) target = $region89
    $region88: #{tpu_custom_call.1} parent=1 // pred_region
      _
    $region89: #{tpu_custom_call.1} parent=1 // pred_fallthru
      _
    // Predicated region
    $region90: #{tpu_custom_call.1} parent=1 // pred_check
      _
    $region91: #{tpu_custom_call.1} parent=1 // pred_check_branch
      %179 = sbr.rel (0) target = $region93
    $region92: #{tpu_custom_call.1} parent=1 // pred_region
      _
    $region93: #{tpu_custom_call.1} parent=1 // pred_fallthru
      _
    // Predicated region
    $region94: #{tpu_custom_call.1} parent=1 // pred_check
      _
    $region95: #{tpu_custom_call.1} parent=1 // pred_check_branch
      %181 = sbr.rel (0) target = $region97
    $region96: #{tpu_custom_call.1} parent=1 // pred_region
      _
    $region97: #{tpu_custom_call.1} parent=1 // pred_fallthru
      _
    // Predicated region
    $region98: #{tpu_custom_call.1} parent=1 // pred_check
      _
    $region99: #{tpu_custom_call.1} parent=1 // pred_check_branch
      %183 = sbr.rel (0) target = $region101
    $region100: #{tpu_custom_call.1} parent=1 // pred_region
      _
    $region101: #{tpu_custom_call.1} parent=1 // pred_fallthru
      _
    // Predicated region
    $region102: #{tpu_custom_call.1} parent=1 // pred_check
      _
    $region103: #{tpu_custom_call.1} parent=1 // pred_check_branch
      %185 = sbr.rel (0) target = $region105
    $region104: #{tpu_custom_call.1} parent=1 // pred_region
      %186 = dma.done [#allocation4], 16
    $region105: #{tpu_custom_call.1} parent=1 // pred_fallthru
      _
    // Predicated region
    $region106: #{tpu_custom_call.1} parent=1 // pred_check
      _
    $region107: #{tpu_custom_call.1} parent=1 // pred_check_branch
      %188 = sbr.rel (0) target = $region109
    $region108: #{tpu_custom_call.1} parent=1 // pred_region
      %189 = dma.done [#allocation7], 32
    $region109: #{tpu_custom_call.1} parent=1 // pred_fallthru
      _
    // Predicated region
    $region110: #{tpu_custom_call.1} parent=1 // pred_check
      _
    $region111: #{tpu_custom_call.1} parent=1 // pred_check_branch
      %191 = sbr.rel (0) target = $region113
    $region112: #{tpu_custom_call.1} parent=1 // pred_region
      %192 = dma.done [#allocation7], 64
    $region113: #{tpu_custom_call.1} parent=1 // pred_fallthru
      _
    // Predicated region
    $region114: #{tpu_custom_call.1} parent=1 // pred_check
      _
    $region115: #{tpu_custom_call.1} parent=1 // pred_check_branch
      %194 = sbr.rel (0) target = $region117
    $region116: #{tpu_custom_call.1} parent=1 // pred_region
      %195 = dma.done [#allocation10], 16
    $region117: #{tpu_custom_call.1} parent=1 // pred_fallthru
      _
    // Predicated region
    $region118: #{tpu_custom_call.1} parent=1 // pred_check
      _
    $region119: #{tpu_custom_call.1} parent=1 // pred_check_branch
      %197 = sbr.rel (0) target = $region121
    $region120: #{tpu_custom_call.1} parent=1 // pred_region
      %198 = dma.done [#allocation10], 16
    $region121: #{tpu_custom_call.1} parent=1 // pred_fallthru
      _
    // Predicated region
    $region122: #{tpu_custom_call.1} parent=1 // pred_check
      _
    $region123: #{tpu_custom_call.1} parent=1 // pred_check_branch
      %200 = sbr.rel (0) target = $region125
    $region124: #{tpu_custom_call.1} parent=1 // pred_region
      %201 = dma.done [#allocation13], 16
    $region125: #{tpu_custom_call.1} parent=1 // pred_fallthru
      _
    // Predicated region
    $region126: #{tpu_custom_call.1} parent=1 // pred_check
      _
    $region127: #{tpu_custom_call.1} parent=1 // pred_check_branch
      %203 = sbr.rel (0) target = $region129
    $region128: #{tpu_custom_call.1} parent=1 // pred_region
      %204 = dma.done [#allocation13], 16
    $region129: #{tpu_custom_call.1} parent=1 // pred_fallthru
      _
    // Predicated region
    $region130: #{tpu_custom_call.1} parent=1 // pred_check
      _
    $region131: #{tpu_custom_call.1} parent=1 // pred_check_branch
      %206 = sbr.rel (0) target = $region133
    $region132: #{tpu_custom_call.1} parent=1 // pred_region
      %207 = dma.done [#allocation16], 16
    $region133: #{tpu_custom_call.1} parent=1 // pred_fallthru
      _
    // Predicated region
    $region134: #{tpu_custom_call.1} parent=1 // pred_check
      _
    $region135: #{tpu_custom_call.1} parent=1 // pred_check_branch
      %209 = sbr.rel (0) target = $region137
    $region136: #{tpu_custom_call.1} parent=1 // pred_region
      %210 = dma.done [#allocation16], 64
    $region137: #{tpu_custom_call.1} parent=1 // pred_fallthru
      _
    // Predicated region
    $region138: #{tpu_custom_call.1} parent=1 // pred_check
      _
    $region139: #{tpu_custom_call.1} parent=1 // pred_check_branch
      %212 = sbr.rel (0) target = $region141
    $region140: #{tpu_custom_call.1} parent=1 // pred_region
      %213 = dma.done [#allocation19], 16
    $region141: #{tpu_custom_call.1} parent=1 // pred_fallthru
      _
    // Predicated region
    $region142: #{tpu_custom_call.1} parent=1 // pred_check
      _
    $region143: #{tpu_custom_call.1} parent=1 // pred_check_branch
      %215 = sbr.rel (0) target = $region145
    $region144: #{tpu_custom_call.1} parent=1 // pred_region
      %216 = dma.done [#allocation19], 16
    $region145: #{tpu_custom_call.1} parent=1 // pred_fallthru
      _
    // Predicated region
    $region146: #{tpu_custom_call.1} parent=1 // pred_check
      _
    $region147: #{tpu_custom_call.1} parent=1 // pred_check_branch
      %218 = sbr.rel (0) target = $region149
    $region148: #{tpu_custom_call.1} parent=1 // pred_region
      %219 = dma.done [#allocation22], 16
    $region149: #{tpu_custom_call.1} parent=1 // pred_fallthru
      _
    %p221 = scmp.eq.s32.totalorder 0, 0
    // Predicated region
    $region150: #{tpu_custom_call.1} parent=1 // pred_check
      %p222 = pneg %p221
    $region151: #{tpu_custom_call.1} parent=1 // pred_check_branch
      %224 = sbr.rel (%p222) target = $region153
    $region152: #{tpu_custom_call.1} parent=1 // pred_region
      %vm225 = vcmask 58368
      %226 = vst.msk [vmem:[#allocation2] sm:$0x3] %vm225, 0.0
    $region153: #{tpu_custom_call.1} parent=1 // pred_fallthru
      _
    %v227 = vld [vmem:[%s1] sm:$0xf]
    %v228 = vld [vmem:[%s1 + $0x4] sm:$0xf]
    %v229 = vld [vmem:[#allocation8] sm:$0x7]
    %v230 = vld [vmem:[#allocation9] sm:$0x1]
    %v232 = vlaneseq
    %v233 = vshrl.u32 %v232, 7
    %v234 = vsub.s32 0, %v233
    %v235 = vrot.slane %v230, %v234
    %v239 = vunpack.c.l.b16 %v227
    %v240 = vunpack.c.l.b16 %v228
    %v241 = vpack.c.b16 %v240, %v239
    %vm242 = vcmask 48128
    %v244 = vsel %vm242, %v241, 0
    %vm246 = vcmask 1042432
    %v248 = vsel %vm246, %v229, 0
    %250 = vmatprep.subr.bf16.mxu0 0
    %251 = vmatpush1.bf16.msra.mxu0 0
    %252 = vmatprep.subr.bf16.mxu0 0
    %253 = vmatpush1.bf16.msra.mxu0 0
    %254 = vmatprep.subr.bf16.mxu0 0
    %255 = vmatpush1.bf16.msra.mxu0 0
    %256 = vmatprep.subr.bf16.mxu0 0
    %257 = vmatpush1.bf16.msra.mxu0 0
    %258 = vmatprep.subr.bf16.mxu0 0
    %259 = vmatpush1.bf16.msra.mxu0 0
    %260 = vmatprep.subr.bf16.mxu0 0
    %261 = vmatpush1.bf16.msra.mxu0 0
    %262 = vmatprep.subr.bf16.mxu0 0
    %263 = vmatpush1.bf16.msra.mxu0 0
    %264 = vmatprep.subr.bf16.mxu0 0
    %265 = vmatpush1.bf16.msra.mxu0 %v248
    %266 = vmatprep.subr.bf16.mxu0 0
    %267 = vmatpush2.bf16.msra.mxu0 0
    %268 = vmatprep.subr.bf16.mxu0 0
    %269 = vmatpush2.bf16.msra.mxu0 0
    %270 = vmatprep.subr.bf16.mxu0 0
    %271 = vmatpush2.bf16.msra.mxu0 0
    %272 = vmatprep.subr.bf16.mxu0 0
    %273 = vmatpush2.bf16.msra.mxu0 0
    %274 = vmatprep.subr.bf16.mxu0 0
    %275 = vmatpush2.bf16.msra.mxu0 0
    %276 = vmatprep.subr.bf16.mxu0 0
    %277 = vmatpush2.bf16.msra.mxu0 0
    %278 = vmatprep.subr.bf16.mxu0 0
    %279 = vmatpush2.bf16.msra.mxu0 0
    %280 = vmatprep.subr.bf16.mxu0 0
    %281 = vmatpush2.bf16.msra.mxu0 0
    %282 = vmatprep.mubr.bf16.mxu0 0
    %283 = vmatmul.mubr.bf16.gmra.mxu0 %v244
    %v284 = vpop.f32.mrf.mxu0
    %v285 = vadd.f32 %v235, %v284
    %v286 = vpop.f32.mrf.mxu0
    %v287 = vpop.f32.mrf.mxu0
    %v288 = vadd.f32 %v235, %v287
    %v289 = vpop.f32.mrf.mxu0
    %290 = vdwg.mxu0
    %v291 = vmax.f32 %v285, 0.0
    %v292 = vmax.f32 %v288, 0.0
    %v293 = vld [vmem:[%s5] sm:$0xf]
    %v294 = vld [vmem:[%s5 + $0x4] sm:$0xf]
    %v295 = vld [vmem:[%s5 + $0x8] sm:$0xf]
    %v296 = vld [vmem:[%s5 + $0xc] sm:$0xf]
    %v297 = vld [vmem:[#allocation11] sm:$0x1]
    %v298 = vpack.c.bf16 %v292, %v291
    %v300 = vlaneseq
    %v301 = vshrl.u32 %v300, 7
    %v302 = vsub.s32 0, %v301
    %v303 = vrot.slane %v297, %v302
    %v309 = vunpack.c.l.b16 %v293
    %v310 = vunpack.c.l.b16 %v294
    %v311 = vunpack.c.l.b16 %v295
    %v312 = vunpack.c.l.b16 %v296
    %v313 = vpack.c.b16 %v310, %v309
    %v314 = vpack.c.b16 %v312, %v311
    %vm317 = vcmask 261120
    %v319 = vsel %vm317, %v298, 0
    %321 = vmatprep.subr.bf16.mxu0 0
    %322 = vmatpush1.bf16.msra.mxu0 0
    %323 = vmatprep.subr.bf16.mxu0 0
    %324 = vmatpush1.bf16.msra.mxu0 0
    %325 = vmatprep.subr.bf16.mxu0 0
    %326 = vmatpush1.bf16.msra.mxu0 0
    %327 = vmatprep.subr.bf16.mxu0 0
    %328 = vmatpush1.bf16.msra.mxu0 0
    %329 = vmatprep.subr.bf16.mxu0 0
    %330 = vmatpush1.bf16.msra.mxu0 0
    %331 = vmatprep.subr.bf16.mxu0 0
    %332 = vmatpush1.bf16.msra.mxu0 0
    %333 = vmatprep.subr.bf16.mxu0 0
    %334 = vmatpush1.bf16.msra.mxu0 %v314
    %335 = vmatprep.subr.bf16.mxu0 0
    %336 = vmatpush1.bf16.msra.mxu0 %v313
    %337 = vmatprep.subr.bf16.mxu0 0
    %338 = vmatpush2.bf16.msra.mxu0 0
    %339 = vmatprep.subr.bf16.mxu0 0
    %340 = vmatpush2.bf16.msra.mxu0 0
    %341 = vmatprep.subr.bf16.mxu0 0
    %342 = vmatpush2.bf16.msra.mxu0 0
    %343 = vmatprep.subr.bf16.mxu0 0
    %344 = vmatpush2.bf16.msra.mxu0 0
    %345 = vmatprep.subr.bf16.mxu0 0
    %346 = vmatpush2.bf16.msra.mxu0 0
    %347 = vmatprep.subr.bf16.mxu0 0
    %348 = vmatpush2.bf16.msra.mxu0 0
    %349 = vmatprep.subr.bf16.mxu0 0
    %350 = vmatpush2.bf16.msra.mxu0 0
    %351 = vmatprep.subr.bf16.mxu0 0
    %352 = vmatpush2.bf16.msra.mxu0 0
    %353 = vmatprep.mubr.bf16.mxu0 0
    %354 = vmatmul.mubr.bf16.gmra.mxu0 %v319
    %v355 = vpop.f32.mrf.mxu0
    %v356 = vadd.f32 %v303, %v355
    %v357 = vpop.f32.mrf.mxu0
    %v358 = vpop.f32.mrf.mxu0
    %v359 = vadd.f32 %v303, %v358
    %v360 = vpop.f32.mrf.mxu0
    %361 = vdwg.mxu0
    %v362 = vmax.f32 %v356, 0.0
    %v363 = vmax.f32 %v359, 0.0
    %v364 = vld [vmem:[%s7] sm:$0xf]
    %v365 = vld [vmem:[%s7 + $0x4] sm:$0xf]
    %v366 = vld [vmem:[%s7 + $0x8] sm:$0xf]
    %v367 = vld [vmem:[%s7 + $0xc] sm:$0xf]
    %v368 = vld [vmem:[#allocation12] sm:$0x1]
    %v369 = vpack.c.bf16 %v363, %v362
    %v371 = vlaneseq
    %v372 = vshrl.u32 %v371, 7
    %v373 = vsub.s32 0, %v372
    %v374 = vrot.slane %v368, %v373
    %v380 = vunpack.c.l.b16 %v364
    %v381 = vunpack.c.l.b16 %v365
    %v382 = vunpack.c.l.b16 %v366
    %v383 = vunpack.c.l.b16 %v367
    %v384 = vpack.c.b16 %v381, %v380
    %v385 = vpack.c.b16 %v383, %v382
    %v389 = vsel %vm317, %v369, 0
    %391 = vmatprep.subr.bf16.mxu0 0
    %392 = vmatpush1.bf16.msra.mxu0 0
    %393 = vmatprep.subr.bf16.mxu0 0
    %394 = vmatpush1.bf16.msra.mxu0 0
    %395 = vmatprep.subr.bf16.mxu0 0
    %396 = vmatpush1.bf16.msra.mxu0 0
    %397 = vmatprep.subr.bf16.mxu0 0
    %398 = vmatpush1.bf16.msra.mxu0 0
    %399 = vmatprep.subr.bf16.mxu0 0
    %400 = vmatpush1.bf16.msra.mxu0 0
    %401 = vmatprep.subr.bf16.mxu0 0
    %402 = vmatpush1.bf16.msra.mxu0 0
    %403 = vmatprep.subr.bf16.mxu0 0
    %404 = vmatpush1.bf16.msra.mxu0 %v385
    %405 = vmatprep.subr.bf16.mxu0 0
    %406 = vmatpush1.bf16.msra.mxu0 %v384
    %407 = vmatprep.subr.bf16.mxu0 0
    %408 = vmatpush2.bf16.msra.mxu0 0
    %409 = vmatprep.subr.bf16.mxu0 0
    %410 = vmatpush2.bf16.msra.mxu0 0
    %411 = vmatprep.subr.bf16.mxu0 0
    %412 = vmatpush2.bf16.msra.mxu0 0
    %413 = vmatprep.subr.bf16.mxu0 0
    %414 = vmatpush2.bf16.msra.mxu0 0
    %415 = vmatprep.subr.bf16.mxu0 0
    %416 = vmatpush2.bf16.msra.mxu0 0
    %417 = vmatprep.subr.bf16.mxu0 0
    %418 = vmatpush2.bf16.msra.mxu0 0
    %419 = vmatprep.subr.bf16.mxu0 0
    %420 = vmatpush2.bf16.msra.mxu0 0
    %421 = vmatprep.subr.bf16.mxu0 0
    %422 = vmatpush2.bf16.msra.mxu0 0
    %423 = vmatprep.mubr.bf16.mxu0 0
    %424 = vmatmul.mubr.bf16.gmra.mxu0 %v389
    %v425 = vpop.f32.mrf.mxu0
    %v426 = vadd.f32 %v374, %v425
    %v427 = vpop.f32.mrf.mxu0
    %v428 = vpop.f32.mrf.mxu0
    %v429 = vadd.f32 %v374, %v428
    %v430 = vpop.f32.mrf.mxu0
    %431 = vdwg.mxu0
    %v432 = vmax.f32 %v426, 0.0
    %v433 = vmax.f32 %v429, 0.0
    %v434 = vld [vmem:[%s9] sm:$0xf]
    %v435 = vld [vmem:[%s9 + $0x4] sm:$0xf]
    %v436 = vld [vmem:[%s9 + $0x8] sm:$0xf]
    %v437 = vld [vmem:[%s9 + $0xc] sm:$0xf]
    %v438 = vld [vmem:[#allocation14] sm:$0x1]
    %v439 = vpack.c.bf16 %v433, %v432
    %v441 = vlaneseq
    %v442 = vshrl.u32 %v441, 7
    %v443 = vsub.s32 0, %v442
    %v444 = vrot.slane %v438, %v443
    %v450 = vunpack.c.l.b16 %v434
    %v451 = vunpack.c.l.b16 %v435
    %v452 = vunpack.c.l.b16 %v436
    %v453 = vunpack.c.l.b16 %v437
    %v454 = vpack.c.b16 %v451, %v450
    %v455 = vpack.c.b16 %v453, %v452
    %v459 = vsel %vm317, %v439, 0
    %461 = vmatprep.subr.bf16.mxu0 0
    %462 = vmatpush1.bf16.msra.mxu0 0
    %463 = vmatprep.subr.bf16.mxu0 0
    %464 = vmatpush1.bf16.msra.mxu0 0
    %465 = vmatprep.subr.bf16.mxu0 0
    %466 = vmatpush1.bf16.msra.mxu0 0
    %467 = vmatprep.subr.bf16.mxu0 0
    %468 = vmatpush1.bf16.msra.mxu0 0
    %469 = vmatprep.subr.bf16.mxu0 0
    %470 = vmatpush1.bf16.msra.mxu0 0
    %471 = vmatprep.subr.bf16.mxu0 0
    %472 = vmatpush1.bf16.msra.mxu0 0
    %473 = vmatprep.subr.bf16.mxu0 0
    %474 = vmatpush1.bf16.msra.mxu0 %v455
    %475 = vmatprep.subr.bf16.mxu0 0
    %476 = vmatpush1.bf16.msra.mxu0 %v454
    %477 = vmatprep.subr.bf16.mxu0 0
    %478 = vmatpush2.bf16.msra.mxu0 0
    %479 = vmatprep.subr.bf16.mxu0 0
    %480 = vmatpush2.bf16.msra.mxu0 0
    %481 = vmatprep.subr.bf16.mxu0 0
    %482 = vmatpush2.bf16.msra.mxu0 0
    %483 = vmatprep.subr.bf16.mxu0 0
    %484 = vmatpush2.bf16.msra.mxu0 0
    %485 = vmatprep.subr.bf16.mxu0 0
    %486 = vmatpush2.bf16.msra.mxu0 0
    %487 = vmatprep.subr.bf16.mxu0 0
    %488 = vmatpush2.bf16.msra.mxu0 0
    %489 = vmatprep.subr.bf16.mxu0 0
    %490 = vmatpush2.bf16.msra.mxu0 0
    %491 = vmatprep.subr.bf16.mxu0 0
    %492 = vmatpush2.bf16.msra.mxu0 0
    %493 = vmatprep.mubr.bf16.mxu0 0
    %494 = vmatmul.mubr.bf16.gmra.mxu0 %v459
    %v495 = vpop.f32.mrf.mxu0
    %v496 = vadd.f32 %v444, %v495
    %v497 = vpop.f32.mrf.mxu0
    %v498 = vpop.f32.mrf.mxu0
    %v499 = vadd.f32 %v444, %v498
    %v500 = vpop.f32.mrf.mxu0
    %501 = vdwg.mxu0
    %v502 = vld [vmem:[#allocation3] sm:$0x1]
    %v503 = vld [vmem:[#allocation2] sm:$0x3]
    %v504 = vpack.c.bf16 %v499, %v496
    %vm505 = vcmask 130048
    %v507 = vsel %vm505, %v502, 0
    %509 = vmatprep.subr.bf16.mxu0 0
    %510 = vmatpush1.bf16.msra.mxu0 0
    %511 = vmatprep.subr.bf16.mxu0 0
    %512 = vmatpush1.bf16.msra.mxu0 0
    %513 = vmatprep.subr.bf16.mxu0 0
    %514 = vmatpush1.bf16.msra.mxu0 0
    %515 = vmatprep.subr.bf16.mxu0 0
    %516 = vmatpush1.bf16.msra.mxu0 0
    %517 = vmatprep.subr.bf16.mxu0 0
    %518 = vmatpush1.bf16.msra.mxu0 0
    %519 = vmatprep.subr.bf16.mxu0 0
    %520 = vmatpush1.bf16.msra.mxu0 0
    %521 = vmatprep.subr.bf16.mxu0 0
    %522 = vmatpush1.bf16.msra.mxu0 0
    %523 = vmatprep.subr.bf16.mxu0 0
    %524 = vmatpush1.bf16.msra.mxu0 %v504
    %525 = vmatprep.subr.bf16.mxu0 0
    %526 = vmatpush2.bf16.msra.mxu0 0
    %527 = vmatprep.subr.bf16.mxu0 0
    %528 = vmatpush2.bf16.msra.mxu0 0
    %529 = vmatprep.subr.bf16.mxu0 0
    %530 = vmatpush2.bf16.msra.mxu0 0
    %531 = vmatprep.subr.bf16.mxu0 0
    %532 = vmatpush2.bf16.msra.mxu0 0
    %533 = vmatprep.subr.bf16.mxu0 0
    %534 = vmatpush2.bf16.msra.mxu0 0
    %535 = vmatprep.subr.bf16.mxu0 0
    %536 = vmatpush2.bf16.msra.mxu0 0
    %537 = vmatprep.subr.bf16.mxu0 0
    %538 = vmatpush2.bf16.msra.mxu0 0
    %539 = vmatprep.subr.bf16.mxu0 0
    %540 = vmatpush2.bf16.msra.mxu0 0
    %541 = vmatprep.mubr.bf16.mxu0 0
    %542 = vmatmul.mubr.bf16.gmra.mxu0 %v507
    %v543 = vpop.f32.mrf.mxu0
    %v544 = vadd.f32 0.0, %v543
    %v545 = vpop.f32.mrf.mxu0
    %v546 = vpop.f32.mrf.mxu0
    %v547 = vpop.f32.mrf.mxu0
    %548 = vdwg.mxu0
    %v549 = vadd.f32 %v503, %v544
    %vm550 = vcmask 58368
    %551 = vst.msk [vmem:[#allocation2] sm:$0x3] %vm550, %v549
    // Predicated region
    $region154: #{tpu_custom_call.1} parent=1 // pred_check
      %p552 = pneg %p221
    $region155: #{tpu_custom_call.1} parent=1 // pred_check_branch
      %554 = sbr.rel (%p552) target = $region157
    $region156: #{tpu_custom_call.1} parent=1 // pred_region
      %v555 = vld [vmem:[#allocation2] sm:$0x3]
      %v556 = vld [vmem:[%s11] sm:$0xf]
      %v557 = vld [vmem:[#allocation15] sm:$0x1]
      %v558 = vpack.c.bf16 %v555, %v555
      %v560 = vlaneseq
      %v561 = vshrl.u32 %v560, 7
      %v562 = vsub.s32 0, %v561
      %v563 = vrot.slane %v557, %v562
      %vm565 = vcmask 64512
      %v567 = vsel %vm565, %v558, 0
      %vm569 = vcmask 1043456
      %v571 = vsel %vm569, %v556, 0
      %573 = vmatprep.subr.bf16.mxu0 0
      %574 = vmatpush1.bf16.msra.mxu0 0
      %575 = vmatprep.subr.bf16.mxu0 0
      %576 = vmatpush1.bf16.msra.mxu0 0
      %577 = vmatprep.subr.bf16.mxu0 0
      %578 = vmatpush1.bf16.msra.mxu0 0
      %579 = vmatprep.subr.bf16.mxu0 0
      %580 = vmatpush1.bf16.msra.mxu0 0
      %581 = vmatprep.subr.bf16.mxu0 0
      %582 = vmatpush1.bf16.msra.mxu0 0
      %583 = vmatprep.subr.bf16.mxu0 0
      %584 = vmatpush1.bf16.msra.mxu0 0
      %585 = vmatprep.subr.bf16.mxu0 0
      %586 = vmatpush1.bf16.msra.mxu0 0
      %587 = vmatprep.subr.bf16.mxu0 0
      %588 = vmatpush1.bf16.msra.mxu0 %v571
      %589 = vmatprep.subr.bf16.mxu0 0
      %590 = vmatpush2.bf16.msra.mxu0 0
      %591 = vmatprep.subr.bf16.mxu0 0
      %592 = vmatpush2.bf16.msra.mxu0 0
      %593 = vmatprep.subr.bf16.mxu0 0
      %594 = vmatpush2.bf16.msra.mxu0 0
      %595 = vmatprep.subr.bf16.mxu0 0
      %596 = vmatpush2.bf16.msra.mxu0 0
      %597 = vmatprep.subr.bf16.mxu0 0
      %598 = vmatpush2.bf16.msra.mxu0 0
      %599 = vmatprep.subr.bf16.mxu0 0
      %600 = vmatpush2.bf16.msra.mxu0 0
      %601 = vmatprep.subr.bf16.mxu0 0
      %602 = vmatpush2.bf16.msra.mxu0 0
      %603 = vmatprep.subr.bf16.mxu0 0
      %604 = vmatpush2.bf16.msra.mxu0 0
      %605 = vmatprep.mubr.bf16.mxu0 0
      %606 = vmatmul.mubr.bf16.gmra.mxu0 %v567
      %v607 = vpop.f32.mrf.mxu0
      %v608 = vadd.f32 %v563, %v607
      %v609 = vpop.f32.mrf.mxu0
      %v610 = vpop.f32.mrf.mxu0
      %v611 = vpop.f32.mrf.mxu0
      %612 = vdwg.mxu0
      %v613 = vmax.f32 %v608, 0.0
      %v614 = vld [vmem:[#allocation17] sm:$0xf]
      %v615 = vld [vmem:[#allocation18] sm:$0x1]
      %v616 = vpack.c.bf16 %v613, %v613
      %v618 = vlaneseq
      %v619 = vshrl.u32 %v618, 7
      %v620 = vsub.s32 0, %v619
      %v621 = vrot.slane %v615, %v620
      %v624 = vsel %vm565, %v616, 0
      %v627 = vsel %vm569, %v614, 0
      %629 = vmatprep.subr.bf16.mxu0 0
      %630 = vmatpush1.bf16.msra.mxu0 0
      %631 = vmatprep.subr.bf16.mxu0 0
      %632 = vmatpush1.bf16.msra.mxu0 0
      %633 = vmatprep.subr.bf16.mxu0 0
      %634 = vmatpush1.bf16.msra.mxu0 0
      %635 = vmatprep.subr.bf16.mxu0 0
      %636 = vmatpush1.bf16.msra.mxu0 0
      %637 = vmatprep.subr.bf16.mxu0 0
      %638 = vmatpush1.bf16.msra.mxu0 0
      %639 = vmatprep.subr.bf16.mxu0 0
      %640 = vmatpush1.bf16.msra.mxu0 0
      %641 = vmatprep.subr.bf16.mxu0 0
      %642 = vmatpush1.bf16.msra.mxu0 0
      %643 = vmatprep.subr.bf16.mxu0 0
      %644 = vmatpush1.bf16.msra.mxu0 %v627
      %645 = vmatprep.subr.bf16.mxu0 0
      %646 = vmatpush2.bf16.msra.mxu0 0
      %647 = vmatprep.subr.bf16.mxu0 0
      %648 = vmatpush2.bf16.msra.mxu0 0
      %649 = vmatprep.subr.bf16.mxu0 0
      %650 = vmatpush2.bf16.msra.mxu0 0
      %651 = vmatprep.subr.bf16.mxu0 0
      %652 = vmatpush2.bf16.msra.mxu0 0
      %653 = vmatprep.subr.bf16.mxu0 0
      %654 = vmatpush2.bf16.msra.mxu0 0
      %655 = vmatprep.subr.bf16.mxu0 0
      %656 = vmatpush2.bf16.msra.mxu0 0
      %657 = vmatprep.subr.bf16.mxu0 0
      %658 = vmatpush2.bf16.msra.mxu0 0
      %659 = vmatprep.subr.bf16.mxu0 0
      %660 = vmatpush2.bf16.msra.mxu0 0
      %661 = vmatprep.mubr.bf16.mxu0 0
      %662 = vmatmul.mubr.bf16.gmra.mxu0 %v624
      %v663 = vpop.f32.mrf.mxu0
      %v664 = vadd.f32 %v621, %v663
      %v665 = vpop.f32.mrf.mxu0
      %v666 = vpop.f32.mrf.mxu0
      %v667 = vpop.f32.mrf.mxu0
      %668 = vdwg.mxu0
      %v669 = vmax.f32 %v664, 0.0
      %v670 = vld [vmem:[%s15] sm:$0xf]
      %v671 = vld [vmem:[#allocation20] sm:$0x1]
      %v672 = vpack.c.bf16 %v669, %v669
      %v674 = vlaneseq
      %v675 = vshrl.u32 %v674, 7
      %v676 = vsub.s32 0, %v675
      %v677 = vrot.slane %v671, %v676
      %v680 = vsel %vm565, %v672, 0
      %v683 = vsel %vm569, %v670, 0
      %685 = vmatprep.subr.bf16.mxu0 0
      %686 = vmatpush1.bf16.msra.mxu0 0
      %687 = vmatprep.subr.bf16.mxu0 0
      %688 = vmatpush1.bf16.msra.mxu0 0
      %689 = vmatprep.subr.bf16.mxu0 0
      %690 = vmatpush1.bf16.msra.mxu0 0
      %691 = vmatprep.subr.bf16.mxu0 0
      %692 = vmatpush1.bf16.msra.mxu0 0
      %693 = vmatprep.subr.bf16.mxu0 0
      %694 = vmatpush1.bf16.msra.mxu0 0
      %695 = vmatprep.subr.bf16.mxu0 0
      %696 = vmatpush1.bf16.msra.mxu0 0
      %697 = vmatprep.subr.bf16.mxu0 0
      %698 = vmatpush1.bf16.msra.mxu0 0
      %699 = vmatprep.subr.bf16.mxu0 0
      %700 = vmatpush1.bf16.msra.mxu0 %v683
      %701 = vmatprep.subr.bf16.mxu0 0
      %702 = vmatpush2.bf16.msra.mxu0 0
      %703 = vmatprep.subr.bf16.mxu0 0
      %704 = vmatpush2.bf16.msra.mxu0 0
      %705 = vmatprep.subr.bf16.mxu0 0
      %706 = vmatpush2.bf16.msra.mxu0 0
      %707 = vmatprep.subr.bf16.mxu0 0
      %708 = vmatpush2.bf16.msra.mxu0 0
      %709 = vmatprep.subr.bf16.mxu0 0
      %710 = vmatpush2.bf16.msra.mxu0 0
      %711 = vmatprep.subr.bf16.mxu0 0
      %712 = vmatpush2.bf16.msra.mxu0 0
      %713 = vmatprep.subr.bf16.mxu0 0
      %714 = vmatpush2.bf16.msra.mxu0 0
      %715 = vmatprep.subr.bf16.mxu0 0
      %716 = vmatpush2.bf16.msra.mxu0 0
      %717 = vmatprep.mubr.bf16.mxu0 0
      %718 = vmatmul.mubr.bf16.gmra.mxu0 %v680
      %v719 = vpop.f32.mrf.mxu0
      %v720 = vadd.f32 %v677, %v719
      %v721 = vpop.f32.mrf.mxu0
      %v722 = vpop.f32.mrf.mxu0
      %v723 = vpop.f32.mrf.mxu0
      %724 = vdwg.mxu0
      %v725 = vld [vmem:[%s17] sm:$0xf]
      %v726 = vld [vmem:[#allocation21] sm:$0x1]
      %v727 = vpack.c.bf16 %v720, %v720
      %v729 = vlaneseq
      %v730 = vshrl.u32 %v729, 7
      %v731 = vsub.s32 0, %v730
      %v732 = vrot.slane %v726, %v731
      %v735 = vsel %vm565, %v727, 0
      %v738 = vsel %vm569, %v725, 0
      %740 = vmatprep.subr.bf16.mxu0 0
      %741 = vmatpush1.bf16.msra.mxu0 0
      %742 = vmatprep.subr.bf16.mxu0 0
      %743 = vmatpush1.bf16.msra.mxu0 0
      %744 = vmatprep.subr.bf16.mxu0 0
      %745 = vmatpush1.bf16.msra.mxu0 0
      %746 = vmatprep.subr.bf16.mxu0 0
      %747 = vmatpush1.bf16.msra.mxu0 0
      %748 = vmatprep.subr.bf16.mxu0 0
      %749 = vmatpush1.bf16.msra.mxu0 0
      %750 = vmatprep.subr.bf16.mxu0 0
      %751 = vmatpush1.bf16.msra.mxu0 0
      %752 = vmatprep.subr.bf16.mxu0 0
      %753 = vmatpush1.bf16.msra.mxu0 0
      %754 = vmatprep.subr.bf16.mxu0 0
      %755 = vmatpush1.bf16.msra.mxu0 %v738
      %756 = vmatprep.subr.bf16.mxu0 0
      %757 = vmatpush2.bf16.msra.mxu0 0
      %758 = vmatprep.subr.bf16.mxu0 0
      %759 = vmatpush2.bf16.msra.mxu0 0
      %760 = vmatprep.subr.bf16.mxu0 0
      %761 = vmatpush2.bf16.msra.mxu0 0
      %762 = vmatprep.subr.bf16.mxu0 0
      %763 = vmatpush2.bf16.msra.mxu0 0
      %764 = vmatprep.subr.bf16.mxu0 0
      %765 = vmatpush2.bf16.msra.mxu0 0
      %766 = vmatprep.subr.bf16.mxu0 0
      %767 = vmatpush2.bf16.msra.mxu0 0
      %768 = vmatprep.subr.bf16.mxu0 0
      %769 = vmatpush2.bf16.msra.mxu0 0
      %770 = vmatprep.subr.bf16.mxu0 0
      %771 = vmatpush2.bf16.msra.mxu0 0
      %772 = vmatprep.mubr.bf16.mxu0 0
      %773 = vmatmul.mubr.bf16.gmra.mxu0 %v735
      %v774 = vpop.f32.mrf.mxu0
      %v775 = vadd.f32 %v732, %v774
      %v776 = vpop.f32.mrf.mxu0
      %v777 = vpop.f32.mrf.mxu0
      %v778 = vpop.f32.mrf.mxu0
      %779 = vdwg.mxu0
      %v780 = vmax.f32 %v775, 0.0
      %v781 = vld [vmem:[%s19] sm:$0xf]
      %v782 = vld [vmem:[%s19 + $0x4] sm:$0xf]
      %v783 = vld [vmem:[%s20] sm:$0x1]
      %v784 = vpack.c.bf16 %v780, %v780
      %v786 = vlaneseq
      %v787 = vshrl.u32 %v786, 7
      %v788 = vsub.s32 0, %v787
      %v789 = vrot.slane %v783, %v788
      %v793 = vunpack.c.l.b16 %v781
      %v794 = vunpack.c.l.b16 %v782
      %v795 = vpack.c.b16 %v794, %v793
      %v798 = vsel %vm505, %v784, 0
      %800 = vmatprep.subr.bf16.mxu0 0
      %801 = vmatpush1.bf16.msra.mxu0 0
      %802 = vmatprep.subr.bf16.mxu0 0
      %803 = vmatpush1.bf16.msra.mxu0 0
      %804 = vmatprep.subr.bf16.mxu0 0
      %805 = vmatpush1.bf16.msra.mxu0 0
      %806 = vmatprep.subr.bf16.mxu0 0
      %807 = vmatpush1.bf16.msra.mxu0 0
      %808 = vmatprep.subr.bf16.mxu0 0
      %809 = vmatpush1.bf16.msra.mxu0 0
      %810 = vmatprep.subr.bf16.mxu0 0
      %811 = vmatpush1.bf16.msra.mxu0 0
      %812 = vmatprep.subr.bf16.mxu0 0
      %813 = vmatpush1.bf16.msra.mxu0 0
      %814 = vmatprep.subr.bf16.mxu0 0
      %815 = vmatpush1.bf16.msra.mxu0 %v795
      %816 = vmatprep.subr.bf16.mxu0 0
      %817 = vmatpush2.bf16.msra.mxu0 0
      %818 = vmatprep.subr.bf16.mxu0 0
      %819 = vmatpush2.bf16.msra.mxu0 0
      %820 = vmatprep.subr.bf16.mxu0 0
      %821 = vmatpush2.bf16.msra.mxu0 0
      %822 = vmatprep.subr.bf16.mxu0 0
      %823 = vmatpush2.bf16.msra.mxu0 0
      %824 = vmatprep.subr.bf16.mxu0 0
      %825 = vmatpush2.bf16.msra.mxu0 0
      %826 = vmatprep.subr.bf16.mxu0 0
      %827 = vmatpush2.bf16.msra.mxu0 0
      %828 = vmatprep.subr.bf16.mxu0 0
      %829 = vmatpush2.bf16.msra.mxu0 0
      %830 = vmatprep.subr.bf16.mxu0 0
      %831 = vmatpush2.bf16.msra.mxu0 0
      %832 = vmatprep.mubr.bf16.mxu0 0
      %833 = vmatmul.mubr.bf16.gmra.mxu0 %v798
      %v834 = vpop.f32.mrf.mxu0
      %v835 = vadd.f32 %v789, %v834
      %v836 = vpop.f32.mrf.mxu0
      %v837 = vpop.f32.mrf.mxu0
      %v838 = vpop.f32.mrf.mxu0
      %839 = vdwg.mxu0
      %v840 = vmax.f32 %v835, 0.0
      %v841 = vld [vmem:[%s21] sm:$0xf]
      %v842 = vld [vmem:[%s21 + $0x4] sm:$0xf]
      %v843 = vld [vmem:[%s22] sm:$0x1]
      %v844 = vpack.c.bf16 %v840, %v840
      %v846 = vlaneseq
      %v847 = vshrl.u32 %v846, 7
      %v848 = vsub.s32 0, %v847
      %v849 = vrot.slane %v843, %v848
      %v853 = vunpack.c.l.b16 %v841
      %v854 = vunpack.c.l.b16 %v842
      %v855 = vpack.c.b16 %v854, %v853
      %v858 = vsel %vm505, %v844, 0
      %860 = vmatprep.subr.bf16.mxu0 0
      %861 = vmatpush1.bf16.msra.mxu0 0
      %862 = vmatprep.subr.bf16.mxu0 0
      %863 = vmatpush1.bf16.msra.mxu0 0
      %864 = vmatprep.subr.bf16.mxu0 0
      %865 = vmatpush1.bf16.msra.mxu0 0
      %866 = vmatprep.subr.bf16.mxu0 0
      %867 = vmatpush1.bf16.msra.mxu0 0
      %868 = vmatprep.subr.bf16.mxu0 0
      %869 = vmatpush1.bf16.msra.mxu0 0
      %870 = vmatprep.subr.bf16.mxu0 0
      %871 = vmatpush1.bf16.msra.mxu0 0
      %872 = vmatprep.subr.bf16.mxu0 0
      %873 = vmatpush1.bf16.msra.mxu0 0
      %874 = vmatprep.subr.bf16.mxu0 0
      %875 = vmatpush1.bf16.msra.mxu0 %v855
      %876 = vmatprep.subr.bf16.mxu0 0
      %877 = vmatpush2.bf16.msra.mxu0 0
      %878 = vmatprep.subr.bf16.mxu0 0
      %879 = vmatpush2.bf16.msra.mxu0 0
      %880 = vmatprep.subr.bf16.mxu0 0
      %881 = vmatpush2.bf16.msra.mxu0 0
      %882 = vmatprep.subr.bf16.mxu0 0
      %883 = vmatpush2.bf16.msra.mxu0 0
      %884 = vmatprep.subr.bf16.mxu0 0
      %885 = vmatpush2.bf16.msra.mxu0 0
      %886 = vmatprep.subr.bf16.mxu0 0
      %887 = vmatpush2.bf16.msra.mxu0 0
      %888 = vmatprep.subr.bf16.mxu0 0
      %889 = vmatpush2.bf16.msra.mxu0 0
      %890 = vmatprep.subr.bf16.mxu0 0
      %891 = vmatpush2.bf16.msra.mxu0 0
      %892 = vmatprep.mubr.bf16.mxu0 0
      %893 = vmatmul.mubr.bf16.gmra.mxu0 %v858
      %v894 = vpop.f32.mrf.mxu0
      %v895 = vadd.f32 %v849, %v894
      %v896 = vpop.f32.mrf.mxu0
      %v897 = vpop.f32.mrf.mxu0
      %v898 = vpop.f32.mrf.mxu0
      %899 = vdwg.mxu0
      %v900 = vxor.u32 %v895, 2147483648
      %v901 = vmul.f32 %v900, 1.442695
      %v902 = vpow.pop %v901
      %v903 = vadd.f32 %v902, 1.0
      %v904 = vrcp.pop %v903
      %v905 = vmul.f32 1.0, %v904
      %v906 = vmul.f32 %v905, 0.9
      %v907 = vadd.f32 %v906, 0.1
      %v908 = vld [vmem:[#allocation6] sm:$0x3]
      %910 = vrot.lane.b32.xlu0 %v908, 8
      %v911 = vpop.permute.xlu0 %910
      %v913 = vmul.f32 %v907, %v911
      %915 = vrot.lane.b32.xlu0 %v913, 120
      %v916 = vpop.permute.xlu0 %915
      %v918 = vadd.f32 %v895, %v916
      %v919 = vld [vmem:[%s23] sm:$0xf]
      %v920 = vpack.c.bf16 %v918, %v918
      %v921 = vld [vmem:[%s24] sm:$0x1]
      %v923 = vlaneseq
      %v924 = vshrl.u32 %v923, 7
      %v925 = vsub.s32 0, %v924
      %v926 = vrot.slane %v921, %v925
      %v929 = vsel %vm565, %v920, 0
      %v932 = vsel %vm569, %v919, 0
      %934 = vmatprep.subr.bf16.mxu0 0
      %935 = vmatpush1.bf16.msra.mxu0 0
      %936 = vmatprep.subr.bf16.mxu0 0
      %937 = vmatpush1.bf16.msra.mxu0 0
      %938 = vmatprep.subr.bf16.mxu0 0
      %939 = vmatpush1.bf16.msra.mxu0 0
      %940 = vmatprep.subr.bf16.mxu0 0
      %941 = vmatpush1.bf16.msra.mxu0 0
      %942 = vmatprep.subr.bf16.mxu0 0
      %943 = vmatpush1.bf16.msra.mxu0 0
      %944 = vmatprep.subr.bf16.mxu0 0
      %945 = vmatpush1.bf16.msra.mxu0 0
      %946 = vmatprep.subr.bf16.mxu0 0
      %947 = vmatpush1.bf16.msra.mxu0 0
      %948 = vmatprep.subr.bf16.mxu0 0
      %949 = vmatpush1.bf16.msra.mxu0 %v932
      %950 = vmatprep.subr.bf16.mxu0 0
      %951 = vmatpush2.bf16.msra.mxu0 0
      %952 = vmatprep.subr.bf16.mxu0 0
      %953 = vmatpush2.bf16.msra.mxu0 0
      %954 = vmatprep.subr.bf16.mxu0 0
      %955 = vmatpush2.bf16.msra.mxu0 0
      %956 = vmatprep.subr.bf16.mxu0 0
      %957 = vmatpush2.bf16.msra.mxu0 0
      %958 = vmatprep.subr.bf16.mxu0 0
      %959 = vmatpush2.bf16.msra.mxu0 0
      %960 = vmatprep.subr.bf16.mxu0 0
      %961 = vmatpush2.bf16.msra.mxu0 0
      %962 = vmatprep.subr.bf16.mxu0 0
      %963 = vmatpush2.bf16.msra.mxu0 0
      %964 = vmatprep.subr.bf16.mxu0 0
      %965 = vmatpush2.bf16.msra.mxu0 0
      %966 = vmatprep.mubr.bf16.mxu0 0
      %967 = vmatmul.mubr.bf16.gmra.mxu0 %v929
      %v968 = vpop.f32.mrf.mxu0
      %v969 = vadd.f32 %v926, %v968
      %v970 = vpop.f32.mrf.mxu0
      %v971 = vpop.f32.mrf.mxu0
      %v972 = vpop.f32.mrf.mxu0
      %973 = vdwg.mxu0
      %975 = vrot.lane.b32.xlu0 %v918, 16
      %v976 = vpop.permute.xlu0 %975
      %979 = vrot.lane.b32.xlu0 %v969, 24
      %v980 = vpop.permute.xlu0 %979
      %v982 = vsel %vm565, %v895, %v907
      %v983 = vsel %vm505, %v982, %v976
      %vm984 = vcmask 195584
      %v985 = vsel %vm984, %v983, %v980
      %vm986 = vcmask 451584
      %987 = vst.msk [vmem:[#allocation23] sm:$0x3] %vm986, %v985
    $region157: #{tpu_custom_call.1} parent=1 // pred_fallthru
      _
    // Predicated region
    $region158: #{tpu_custom_call.1} parent=1 // pred_check
      _
    $region159: #{tpu_custom_call.1} parent=1 // pred_check_branch
      %989 = sbr.rel (0) target = $region161
    $region160: #{tpu_custom_call.1} parent=1 // pred_region
      %s991 = ssub.s32 32, 32
      %992 = vsyncadd [#allocation5], %s991
      %s994 = sshll.u32 [#allocation23], 4
      %s995 = int_to_ptr.vmem [resolvable:$true] %s994
      %997 = dma.vmem_to_hbm [thread:$0]  %s995, 32, %s25, [#allocation5]
    $region161: #{tpu_custom_call.1} parent=1 // pred_fallthru
      _
    // Predicated region
    $region162: #{tpu_custom_call.1} parent=1 // pred_check
      _
    $region163: #{tpu_custom_call.1} parent=1 // pred_check_branch
      %999 = sbr.rel (0) target = $region165
    $region164: #{tpu_custom_call.1} parent=1 // pred_region
      %1000 = dma.done [#allocation5], 32
    $region165: #{tpu_custom_call.1} parent=1 // pred_fallthru
      _
    %1001 = vsyncpa [#allocation4], 1
    %1002 = vsyncpa [#allocation7], 1
    %1003 = vsyncpa [#allocation10], 1
    %1004 = vsyncpa [#allocation13], 1
    %1005 = vsyncpa [#allocation16], 1
    %1006 = vsyncpa [#allocation19], 1
    %1007 = vsyncpa [#allocation22], 1
    %1008 = vsyncpa [#allocation5], 1

</llo_original>
